<compile_context>
chip_gen: v7x
topology: tpu7x:2x2x1
jax: 0.10.0
libtpu: 0.0.40
codegen_flags: <defaults>
</compile_context>

<pallas_src>
import functools

import jax
import jax.numpy as jnp
from jax.experimental import pallas as pl
from jax.experimental.pallas import tpu as pltpu


def _round_up(v, m):
    return ((v + m - 1) // m) * m


def _fc_kernel(x_ref, w1_ref, t1_ref, w2_ref, t2_ref, w3_ref, b3_ref, o_ref):
    # fc1 + bn1 (scale folded into w1, bias+shift folded into t1) + relu.
    # Dropout == identity in eval mode.  x arrives f32 straight from HBM; cast
    # the tile to bf16 here so the MXU runs its native bf16 path while all
    # accumulation / elementwise math stays f32.
    x = x_ref[...].astype(jnp.bfloat16)
    h1 = jnp.dot(x, w1_ref[...], preferred_element_type=jnp.float32)
    h1 = jnp.maximum(h1 + t1_ref[...], 0.0)

    # fc2 + bn2 (folded) + relu.
    h2 = jnp.dot(h1.astype(jnp.bfloat16), w2_ref[...],
                 preferred_element_type=jnp.float32)
    h2 = jnp.maximum(h2 + t2_ref[...], 0.0)

    # fc3 + sigmoid (exp + approx reciprocal both go to the otherwise-idle EUP).
    logits = jnp.dot(h2.astype(jnp.bfloat16), w3_ref[...],
                     preferred_element_type=jnp.float32)
    logits = logits + b3_ref[...]
    o_ref[...] = pl.reciprocal(1.0 + jnp.exp(-logits),
                               approx=True).astype(o_ref.dtype)


def _pick_batch_tile(B, d_in, h1, h2, npad, *, tb_cap=2048, vmem_budget=14 << 20):
    """VMEM-aware batch-tile selection, valid on v5e/v6e/v7x defaults.

    - Big tiles amortize per-grid-step overhead + step-boundary DMA
      (cap 2048, multiple of 256 -- sweepable).
    - Budget stays under v5e's 16 MiB default scoped-VMEM (v6e/v7x have more;
      v7x physical VMEM is 64 MiB so we do not assume v6e's 128 MiB headroom).
    - Keep >= 2 tiles when B allows so v7x's second TensorCore gets work.
    - Round small-B tiles to 16 rows so bf16 tiles stay cleanly packed.
    """
    # Resident operands (constant index_map) are DMA'd once but still get the
    # default two VMEM buffers each: bf16 weights + f32 shifts.
    resident = 2 * (2 * (d_in * h1 + h1 * h2 + h2 * npad)
                    + 4 * (h1 + h2 + npad))
    # Per batch-row bytes: double-buffered f32 x tile + double-buffered bf16
    # out tile + f32 intermediates (h1, h2 activations, logits).
    per_row = 2 * d_in * 4 + 2 * npad * 2 + (h1 + h2 + npad) * 4
    tb_fit = max(256, ((vmem_budget - resident) // per_row) // 256 * 256)
    tb = min(tb_cap, tb_fit)
    if B > 256:
        tb = min(tb, _round_up(pl.cdiv(B, 2), 256))   # >= 2 tiles for megacore
    tb = min(tb, _round_up(B, 16))
    return max(tb, 16)


def fc_network_forward(x, params, *, num_classes):
    """x: (B, D_in) float32. params: prepared kernel operands (see init_params)."""
    B, d_in = x.shape
    h1 = params["w1"].shape[1]
    h2 = params["w2"].shape[1]
    npad = params["w3"].shape[1]              # padded class dim (multiple of 128)

    tb = _pick_batch_tile(B, d_in, h1, h2, npad)
    n_tiles = pl.cdiv(B, tb)

    def resident(arr):  # whole array, same block every grid step -> DMA'd once
        return pl.BlockSpec(arr.shape, lambda i: (0,) * arr.ndim)

    out = pl.pallas_call(
        _fc_kernel,
        out_shape=jax.ShapeDtypeStruct((B, npad), jnp.bfloat16),
        grid_spec=pltpu.PrefetchScalarGridSpec(
            num_scalar_prefetch=0,
            grid=(n_tiles,),
            in_specs=[
                # x streamed in f32; last tile may be partial (masked by Pallas).
                pl.BlockSpec((tb, d_in), lambda i: (i, 0)),
                resident(params["w1"]), resident(params["t1"]),
                resident(params["w2"]), resident(params["t2"]),
                resident(params["w3"]), resident(params["b3"]),
            ],
            out_specs=pl.BlockSpec((tb, npad), lambda i: (i, 0)),
        ),
        compiler_params=pltpu.CompilerParams(
            # Batch tiles are independent -> shard across TCs on v7x.
            dimension_semantics=("parallel",),
            # Headroom so the larger tile never hits v5e's 16 MiB default.
            vmem_limit_bytes=32 * 1024 * 1024),
    )(x, params["w1"], params["t1"],
      params["w2"], params["t2"],
      params["w3"], params["b3"])
    # Tiny epilogue: lane-slice back to num_classes, restore f32 output dtype.
    return out[:, :num_classes].astype(jnp.float32)


def init_params(key, input_dim, hidden_dim1, hidden_dim2, num_classes):
    """Deterministic synthetic parameters.

    Returns (kernel_params, raw_params):
      kernel_params: BN-folded, bf16-weight operands consumed by the kernel.
      raw_params:    original unfused Linear + BatchNorm1d parameters (f32),
                     used by the reference to validate the fold end-to-end.
    """
    ks = jax.random.split(key, 12)
    eps = 1e-5

    def linear(kw, kb, fan_in, fan_out):
        bound = 1.0 / jnp.sqrt(fan_in)
        w = jax.random.uniform(kw, (fan_in, fan_out), jnp.float32, -bound, bound)
        b = jax.random.uniform(kb, (fan_out,), jnp.float32, -bound, bound)
        return w, b

    w1, b1 = linear(ks[0], ks[1], input_dim, hidden_dim1)
    w2, b2 = linear(ks[2], ks[3], hidden_dim1, hidden_dim2)
    w3, b3 = linear(ks[4], ks[5], hidden_dim2, num_classes)

    # BatchNorm1d params (gamma, beta) and running stats (mean, var) — eval mode.
    g1 = 1.0 + 0.1 * jax.random.normal(ks[6], (hidden_dim1,), jnp.float32)
    be1 = 0.1 * jax.random.normal(ks[7], (hidden_dim1,), jnp.float32)
    m1 = 0.05 * jax.random.normal(ks[8], (hidden_dim1,), jnp.float32)
    v1 = jnp.abs(1.0 + 0.1 * jax.random.normal(ks[9], (hidden_dim1,), jnp.float32))

    g2 = 1.0 + 0.1 * jax.random.normal(ks[10], (hidden_dim2,), jnp.float32)
    be2 = 0.1 * jax.random.normal(ks[11], (hidden_dim2,), jnp.float32)
    m2 = jnp.zeros((hidden_dim2,), jnp.float32)
    v2 = jnp.ones((hidden_dim2,), jnp.float32)

    raw = {"w1": w1, "b1": b1, "g1": g1, "be1": be1, "m1": m1, "v1": v1,
           "w2": w2, "b2": b2, "g2": g2, "be2": be2, "m2": m2, "v2": v2,
           "w3": w3, "b3": b3, "eps": eps}

    # Fold BN scale into weights and BN shift + linear bias into a single shift:
    #   bn(x@W + b) = (x@W + b - m) * g/sqrt(v+eps) + beta = x@(W*s) + t
    def fold(w, b, g, beta, mean, var):
        s = g / jnp.sqrt(var + eps)
        w_folded = (w * s[None, :]).astype(jnp.bfloat16)
        t = ((b - mean) * s + beta).reshape(1, -1).astype(jnp.float32)
        return w_folded, t

    w1f, t1 = fold(w1, b1, g1, be1, m1, v1)
    w2f, t2 = fold(w2, b2, g2, be2, m2, v2)

    # Pad last layer's output dim to a multiple of 128 for lane alignment
    # (kept at 128 — kernel is HBM-bound, padding further only adds stores).
    npad = max(128, ((num_classes + 127) // 128) * 128)
    w3p = jnp.zeros((hidden_dim2, npad), jnp.float32).at[:, :num_classes].set(w3)
    b3p = jnp.zeros((1, npad), jnp.float32).at[0, :num_classes].set(b3)

    kernel_params = {"w1": w1f, "t1": t1,
                     "w2": w2f, "t2": t2,
                     "w3": w3p.astype(jnp.bfloat16), "b3": b3p}
    return kernel_params, raw


def reference_forward(x, raw, num_classes):
    """Unfused f32 reference: Linear -> BatchNorm1d(eval) -> ReLU, twice, then
    Linear -> sigmoid. Validates both the BN/bias fold and the bf16 kernel."""
    eps = raw["eps"]
    h = x @ raw["w1"] + raw["b1"]
    h = (h - raw["m1"]) / jnp.sqrt(raw["v1"] + eps) * raw["g1"] + raw["be1"]
    h = jnp.maximum(h, 0.0)
    h = h @ raw["w2"] + raw["b2"]
    h = (h - raw["m2"]) / jnp.sqrt(raw["v2"] + eps) * raw["g2"] + raw["be2"]
    h = jnp.maximum(h, 0.0)
    logits = h @ raw["w3"] + raw["b3"]
    return jax.nn.sigmoid(logits)[:, :num_classes]


if __name__ == "__main__":
    # Small shapes consistent with the module's structure (scaled down).
    # B=300 exercises a multi-tile grid (2 tiles of 256) with a partial,
    # Pallas-masked last tile; no wrapper-side padding or casting of x.
    B, INPUT_DIM, H1, H2, NUM_CLASSES = 300, 512, 256, 128, 15

    key = jax.random.PRNGKey(0)
    kx, kp = jax.random.split(key)
    x = jax.random.normal(kx, (B, INPUT_DIM), jnp.float32)
    kernel_params, raw_params = init_params(kp, INPUT_DIM, H1, H2, NUM_CLASSES)

    fwd = jax.jit(functools.partial(fc_network_forward, num_classes=NUM_CLASSES))
    out = fwd(x, kernel_params)
    out = jax.block_until_ready(out)

    ref = reference_forward(x, raw_params, NUM_CLASSES)
    assert out.shape == (B, NUM_CLASSES), out.shape
    # bf16 matmul operands + bf16 output store + approx reciprocal ->
    # tolerance loosened vs a pure-f32 reference.
    max_err = float(jnp.max(jnp.abs(out - ref)))
    assert jnp.allclose(out, ref, atol=2e-2, rtol=2e-2), max_err

    print("KERNEL_OK")
</pallas_src>

<mosaic_0001>
module attributes {stable_mosaic.version = 11 : i64} {
  func.func @_fc_kernel(%arg0: i32, %arg1: memref<256x512xf32, #tpu.memory_space<vmem>>, %arg2: memref<512x256xbf16, #tpu.memory_space<vmem>>, %arg3: memref<1x256xf32, #tpu.memory_space<vmem>>, %arg4: memref<256x128xbf16, #tpu.memory_space<vmem>>, %arg5: memref<1x128xf32, #tpu.memory_space<vmem>>, %arg6: memref<128x128xbf16, #tpu.memory_space<vmem>>, %arg7: memref<1x128xf32, #tpu.memory_space<vmem>>, %arg8: memref<256x128xbf16, #tpu.memory_space<vmem>>) attributes {dimension_semantics = [#tpu.dimension_semantics<parallel>], iteration_bounds = array<i64: 2>, scalar_prefetch = 0 : i64, scratch_operands = 0 : i64, tpu.core_type = #tpu.core_type<tc>, window_params = [{transform_indices = @transform_0, window_bounds = array<i64: 256, 512>}, {pipeline_mode = #tpu.pipeline_mode<synchronous>, transform_indices = @transform_1, window_bounds = array<i64: 512, 256>}, {pipeline_mode = #tpu.pipeline_mode<synchronous>, transform_indices = @transform_2, window_bounds = array<i64: 1, 256>}, {pipeline_mode = #tpu.pipeline_mode<synchronous>, transform_indices = @transform_3, window_bounds = array<i64: 256, 128>}, {pipeline_mode = #tpu.pipeline_mode<synchronous>, transform_indices = @transform_4, window_bounds = array<i64: 1, 128>}, {pipeline_mode = #tpu.pipeline_mode<synchronous>, transform_indices = @transform_5, window_bounds = array<i64: 128, 128>}, {pipeline_mode = #tpu.pipeline_mode<synchronous>, transform_indices = @transform_6, window_bounds = array<i64: 1, 128>}, {transform_indices = @transform_7, window_bounds = array<i64: 256, 128>}]} {
    %c0 = arith.constant 0 : index
    %c0_0 = arith.constant 0 : index
    %0 = vector.load %arg1[%c0, %c0_0] : memref<256x512xf32, #tpu.memory_space<vmem>>, vector<256x512xf32>
    %1 = arith.truncf %0 : vector<256x512xf32> to vector<256x512xbf16>
    %c0_1 = arith.constant 0 : index
    %c0_2 = arith.constant 0 : index
    %2 = vector.load %arg2[%c0_1, %c0_2] : memref<512x256xbf16, #tpu.memory_space<vmem>>, vector<512x256xbf16>
    %cst = arith.constant dense<0.000000e+00> : vector<256x256xf32>
    %3 = tpu.matmul %1, %2, %cst {dimension_numbers = #tpu.dot_dimension_numbers<[1], [0], [0], [1], [0, 0, 1, 1], [], []>} : vector<256x512xbf16>, vector<512x256xbf16>, vector<256x256xf32> -> vector<256x256xf32>
    %c0_3 = arith.constant 0 : index
    %c0_4 = arith.constant 0 : index
    %4 = vector.load %arg3[%c0_3, %c0_4] : memref<1x256xf32, #tpu.memory_space<vmem>>, vector<1x256xf32>
    %5 = vector.broadcast %4 : vector<1x256xf32> to vector<256x256xf32>
    %6 = arith.addf %3, %5 : vector<256x256xf32>
    %cst_5 = arith.constant 0.000000e+00 : f32
    %7 = vector.broadcast %cst_5 : f32 to vector<256x256xf32>
    %8 = arith.maximumf %6, %7 : vector<256x256xf32>
    %9 = arith.truncf %8 : vector<256x256xf32> to vector<256x256xbf16>
    %c0_6 = arith.constant 0 : index
    %c0_7 = arith.constant 0 : index
    %10 = vector.load %arg4[%c0_6, %c0_7] : memref<256x128xbf16, #tpu.memory_space<vmem>>, vector<256x128xbf16>
    %cst_8 = arith.constant dense<0.000000e+00> : vector<256x128xf32>
    %11 = tpu.matmul %9, %10, %cst_8 {dimension_numbers = #tpu.dot_dimension_numbers<[1], [0], [0], [1], [0, 0, 1, 1], [], []>} : vector<256x256xbf16>, vector<256x128xbf16>, vector<256x128xf32> -> vector<256x128xf32>
    %c0_9 = arith.constant 0 : index
    %c0_10 = arith.constant 0 : index
    %12 = vector.load %arg5[%c0_9, %c0_10] : memref<1x128xf32, #tpu.memory_space<vmem>>, vector<1x128xf32>
    %13 = vector.broadcast %12 : vector<1x128xf32> to vector<256x128xf32>
    %14 = arith.addf %11, %13 : vector<256x128xf32>
    %cst_11 = arith.constant 0.000000e+00 : f32
    %15 = vector.broadcast %cst_11 : f32 to vector<256x128xf32>
    %16 = arith.maximumf %14, %15 : vector<256x128xf32>
    %17 = arith.truncf %16 : vector<256x128xf32> to vector<256x128xbf16>
    %c0_12 = arith.constant 0 : index
    %c0_13 = arith.constant 0 : index
    %18 = vector.load %arg6[%c0_12, %c0_13] : memref<128x128xbf16, #tpu.memory_space<vmem>>, vector<128x128xbf16>
    %cst_14 = arith.constant dense<0.000000e+00> : vector<256x128xf32>
    %19 = tpu.matmul %17, %18, %cst_14 {dimension_numbers = #tpu.dot_dimension_numbers<[1], [0], [0], [1], [0, 0, 1, 1], [], []>} : vector<256x128xbf16>, vector<128x128xbf16>, vector<256x128xf32> -> vector<256x128xf32>
    %c0_15 = arith.constant 0 : index
    %c0_16 = arith.constant 0 : index
    %20 = vector.load %arg7[%c0_15, %c0_16] : memref<1x128xf32, #tpu.memory_space<vmem>>, vector<1x128xf32>
    %21 = vector.broadcast %20 : vector<1x128xf32> to vector<256x128xf32>
    %22 = arith.addf %19, %21 : vector<256x128xf32>
    %cst_17 = arith.constant 0.000000e+00 : f32
    %23 = vector.broadcast %cst_17 : f32 to vector<256x128xf32>
    %24 = arith.subf %23, %22 : vector<256x128xf32>
    %25 = math.exp %24 : vector<256x128xf32>
    %cst_18 = arith.constant 1.000000e+00 : f32
    %26 = vector.broadcast %cst_18 : f32 to vector<256x128xf32>
    %27 = arith.addf %26, %25 : vector<256x128xf32>
    %28 = tpu.reciprocal %27 {approx = true} : vector<256x128xf32> -> vector<256x128xf32>
    %29 = arith.truncf %28 : vector<256x128xf32> to vector<256x128xbf16>
    %c0_19 = arith.constant 0 : index
    %c0_20 = arith.constant 0 : index
    %30 = vector.load %arg8[%c0_19, %c0_20] : memref<256x128xbf16, #tpu.memory_space<vmem>>, vector<256x128xbf16>
    tpu.vector_store %arg8[%c0_19, %c0_20], %29 {strides = array<i32>} : memref<256x128xbf16, #tpu.memory_space<vmem>>, vector<256x128xbf16>,
    return
  }
  func.func @transform_0(%arg0: i32) -> (i32, i32) {
    %c0_i32 = arith.constant 0 : i32
    %c0_i32_0 = arith.constant 0 : i32
    return %arg0, %c0_i32 : i32, i32
  }
  func.func @transform_1(%arg0: i32) -> (i32, i32) {
    %c0_i32 = arith.constant 0 : i32
    %c0_i32_0 = arith.constant 0 : i32
    %c0_i32_1 = arith.constant 0 : i32
    return %c0_i32, %c0_i32_0 : i32, i32
  }
  func.func @transform_2(%arg0: i32) -> (i32, i32) {
    %c0_i32 = arith.constant 0 : i32
    %c0_i32_0 = arith.constant 0 : i32
    %c0_i32_1 = arith.constant 0 : i32
    return %c0_i32, %c0_i32_0 : i32, i32
  }
  func.func @transform_3(%arg0: i32) -> (i32, i32) {
    %c0_i32 = arith.constant 0 : i32
    %c0_i32_0 = arith.constant 0 : i32
    %c0_i32_1 = arith.constant 0 : i32
    return %c0_i32, %c0_i32_0 : i32, i32
  }
  func.func @transform_4(%arg0: i32) -> (i32, i32) {
    %c0_i32 = arith.constant 0 : i32
    %c0_i32_0 = arith.constant 0 : i32
    %c0_i32_1 = arith.constant 0 : i32
    return %c0_i32, %c0_i32_0 : i32, i32
  }
  func.func @transform_5(%arg0: i32) -> (i32, i32) {
    %c0_i32 = arith.constant 0 : i32
    %c0_i32_0 = arith.constant 0 : i32
    %c0_i32_1 = arith.constant 0 : i32
    return %c0_i32, %c0_i32_0 : i32, i32
  }
  func.func @transform_6(%arg0: i32) -> (i32, i32) {
    %c0_i32 = arith.constant 0 : i32
    %c0_i32_0 = arith.constant 0 : i32
    %c0_i32_1 = arith.constant 0 : i32
    return %c0_i32, %c0_i32_0 : i32, i32
  }
  func.func @transform_7(%arg0: i32) -> (i32, i32) {
    %c0_i32 = arith.constant 0 : i32
    %c0_i32_0 = arith.constant 0 : i32
    return %arg0, %c0_i32 : i32, i32
  }
}

</mosaic_0001>

<llo_original>
// kernel: fc_network_forward.1
$region0: #{fc_network_forward.1}
  #allocation0 [shape = 'u32[]', space=smem, size = 0x4, offset = 0x4, fixed_abs, tag = 'smem constant byte address 0x4 - core index']
  #allocation1 [shape = 'u32[144,128]{1,0:T(1,128)}', space=vmem, size = 0x12000, scoped, tag = 'internal scratch']
  %s0 = inlined_call_operand.hbm [shape: f32[300,512], index: 0, kind: input, shape index: {}]
  %s1 = inlined_call_operand.hbm [shape: bf16[512,256], index: 1, kind: input, shape index: {}]
  %s2 = inlined_call_operand.vmem [shape: f32[1,256], index: 2, kind: input, shape index: {}]
  %s3 = inlined_call_operand.hbm [shape: bf16[256,128], index: 3, kind: input, shape index: {}]
  %s4 = inlined_call_operand.vmem [shape: f32[1,128], index: 4, kind: input, shape index: {}]
  %s5 = inlined_call_operand.hbm [shape: bf16[128,128], index: 5, kind: input, shape index: {}]
  %s6 = inlined_call_operand.hbm [shape: f32[1,128], index: 6, kind: input, shape index: {}]
  %s7 = inlined_call_operand.vmem [shape: bf16[300,128], index: 7, kind: output, shape index: {}]
  %s8 = sld [smem:[#allocation0]]
  $region125: #{fc_network_forward.1} parent=0
    _
  %s10 = ssub.s32 1, %s8
  %s11 = scalar_select 0, %s10, %s8
  $region1: #{fc_network_forward.1} parent=0
    #allocation2 [shape = 'u8[1048576]{0}', space=vmem, size = 0x100000, scoped, tag = 'input window, operand 0']
    #allocation3 [shape = 's32[2]{0}', space=sflag, size = 0x8, scoped, tag = 'scoped memory for fc_network_forward.1']
    #allocation4 [shape = 'u8[262144]{0}', space=vmem, size = 0x40000, scoped, tag = 'input window, operand 1, single buffered']
    #allocation5 [shape = 's32[1]{0}', space=sflag, size = 0x4, scoped, tag = 'scoped memory for fc_network_forward.1']
    #allocation6 [shape = 'u8[65536]{0}', space=vmem, size = 0x10000, scoped, tag = 'input window, operand 3, single buffered']
    #allocation7 [shape = 'u8[32768]{0}', space=vmem, size = 0x8000, scoped, tag = 'input window, operand 5, single buffered']
    #allocation8 [shape = 's32[1]{0}', space=sflag, size = 0x4, scoped, tag = 'scoped memory for fc_network_forward.1']
    #allocation9 [shape = 'u8[512]{0}', space=vmem, size = 0x400, scoped, tag = 'input window, operand 6, single buffered']
    #allocation10 [shape = 'u8[131072]{0}', space=vmem, size = 0x20000, scoped, tag = 'output window, operand 0']
    %12 = vsyncpa [#allocation3], 0
    %s13 = scalar_lea.sflag [#allocation3], 1
    %14 = vsyncpa %s13, 0
    %15 = vsyncpa [#allocation5], 0
    %16 = vsyncpa [#allocation8], 0
    loop: start=0, step=1, limit=4
    $region2: #{fc_network_forward.1} parent=1 // loop_pre_header
      _
    $region3: #{fc_network_forward.1} parent=1 // loop_header
      %s18 = sphi 0, %s22
      %p19 = scmp.ge.s32.totalorder %s18, 4
      %s28 = sphi 0, %s30
      %s31 = sphi 0, %s28
      %s32 = sphi 0, %s31
      %s48 = sphi 0, %s32
      %s52 = sphi 0, %s52
      %s54 = sphi 0, %s52
      %s55 = sphi 0, %s54
      %s69 = sphi 0, %s55
      %s73 = sphi 0, %s73
      %s75 = sphi 0, %s73
      %s76 = sphi 0, %s75
      %s90 = sphi 0, %s76
      %s94 = sphi 0, %s94
      %s96 = sphi 0, %s94
      %s97 = sphi 0, %s96
      %s111 = sphi 0, %s97
      %s115 = sphi 0, %s115
      %s117 = sphi 0, %s115
      %s118 = sphi 0, %s117
      %s132 = sphi 0, %s118
      %s136 = sphi 0, %s136
      %s138 = sphi 0, %s136
      %s139 = sphi 0, %s138
      %s153 = sphi 0, %s139
      %s157 = sphi 0, %s157
      %s159 = sphi 0, %s157
      %s160 = sphi 0, %s159
      %s174 = sphi 0, %s160
      %s180 = sphi 0, %s182
      %s183 = sphi 0, %s180
      %s184 = sphi 0, %s183
      %s200 = sphi 0, %s184
    $region4: #{fc_network_forward.1} parent=1 // loop_header_branch
      %21 = sbr.rel (%p19) target = $region8
    $region5: #{fc_network_forward.1} parent=1 // loop_body
      %s23 = ssub.s32 %s18, 1
      %s24 = ssub.s32 %s18, 2
      %s25 = sadd.s32 %s18, 1
      %s26 = ssub.s32 %s18, %s25
      %p27 = scmp.eq.s32.totalorder %s26, 0
      %s29 = sadd.s32 %s28, 1
      %s30 = scalar_select %p27, %s28, %s29
      %p33 = pneg %p27
      %p34 = scmp.eq.s32.totalorder %s18, 1
      %p35 = por %p33, %p34
      %p36 = scmp.ne.s32.totalorder %s28, %s31
      %p37 = scmp.eq.s32.totalorder %s18, 0
      %p38 = por %p36, %p37
      %p39 = scmp.ne.s32.totalorder %s28, %s31
      %p40 = scmp.eq.s32.totalorder %s23, 1
      %p41 = por %p39, %p40
      %p42 = scmp.ne.s32.totalorder %s31, %s32
      %p43 = scmp.eq.s32.totalorder %s23, 0
      %p44 = por %p42, %p43
      %p45 = scmp.ne.s32.totalorder %s31, %s32
      %p46 = scmp.eq.s32.totalorder %s24, 1
      %p47 = por %p45, %p46
      %p49 = scmp.ne.s32.totalorder %s32, %s48
      %p50 = scmp.eq.s32.totalorder %s24, 0
      %p51 = por %p49, %p50
      %s53 = sadd.s32 %s52, 1
      %p56 = scmp.eq.s32.totalorder %s18, 1
      %p57 = scmp.ne.s32.totalorder %s52, %s54
      %p58 = scmp.eq.s32.totalorder %s18, 0
      %p59 = por %p57, %p58
      %p60 = scmp.ne.s32.totalorder %s52, %s54
      %p61 = scmp.eq.s32.totalorder %s23, 1
      %p62 = por %p60, %p61
      %p63 = scmp.ne.s32.totalorder %s54, %s55
      %p64 = scmp.eq.s32.totalorder %s23, 0
      %p65 = por %p63, %p64
      %p66 = scmp.ne.s32.totalorder %s54, %s55
      %p67 = scmp.eq.s32.totalorder %s24, 1
      %p68 = por %p66, %p67
      %p70 = scmp.ne.s32.totalorder %s55, %s69
      %p71 = scmp.eq.s32.totalorder %s24, 0
      %p72 = por %p70, %p71
      %s74 = sadd.s32 %s73, 1
      %p77 = scmp.eq.s32.totalorder %s18, 1
      %p78 = scmp.ne.s32.totalorder %s73, %s75
      %p79 = scmp.eq.s32.totalorder %s18, 0
      %p80 = por %p78, %p79
      %p81 = scmp.ne.s32.totalorder %s73, %s75
      %p82 = scmp.eq.s32.totalorder %s23, 1
      %p83 = por %p81, %p82
      %p84 = scmp.ne.s32.totalorder %s75, %s76
      %p85 = scmp.eq.s32.totalorder %s23, 0
      %p86 = por %p84, %p85
      %p87 = scmp.ne.s32.totalorder %s75, %s76
      %p88 = scmp.eq.s32.totalorder %s24, 1
      %p89 = por %p87, %p88
      %p91 = scmp.ne.s32.totalorder %s76, %s90
      %p92 = scmp.eq.s32.totalorder %s24, 0
      %p93 = por %p91, %p92
      %s95 = sadd.s32 %s94, 1
      %p98 = scmp.eq.s32.totalorder %s18, 1
      %p99 = scmp.ne.s32.totalorder %s94, %s96
      %p100 = scmp.eq.s32.totalorder %s18, 0
      %p101 = por %p99, %p100
      %p102 = scmp.ne.s32.totalorder %s94, %s96
      %p103 = scmp.eq.s32.totalorder %s23, 1
      %p104 = por %p102, %p103
      %p105 = scmp.ne.s32.totalorder %s96, %s97
      %p106 = scmp.eq.s32.totalorder %s23, 0
      %p107 = por %p105, %p106
      %p108 = scmp.ne.s32.totalorder %s96, %s97
      %p109 = scmp.eq.s32.totalorder %s24, 1
      %p110 = por %p108, %p109
      %p112 = scmp.ne.s32.totalorder %s97, %s111
      %p113 = scmp.eq.s32.totalorder %s24, 0
      %p114 = por %p112, %p113
      %s116 = sadd.s32 %s115, 1
      %p119 = scmp.eq.s32.totalorder %s18, 1
      %p120 = scmp.ne.s32.totalorder %s115, %s117
      %p121 = scmp.eq.s32.totalorder %s18, 0
      %p122 = por %p120, %p121
      %p123 = scmp.ne.s32.totalorder %s115, %s117
      %p124 = scmp.eq.s32.totalorder %s23, 1
      %p125 = por %p123, %p124
      %p126 = scmp.ne.s32.totalorder %s117, %s118
      %p127 = scmp.eq.s32.totalorder %s23, 0
      %p128 = por %p126, %p127
      %p129 = scmp.ne.s32.totalorder %s117, %s118
      %p130 = scmp.eq.s32.totalorder %s24, 1
      %p131 = por %p129, %p130
      %p133 = scmp.ne.s32.totalorder %s118, %s132
      %p134 = scmp.eq.s32.totalorder %s24, 0
      %p135 = por %p133, %p134
      %s137 = sadd.s32 %s136, 1
      %p140 = scmp.eq.s32.totalorder %s18, 1
      %p141 = scmp.ne.s32.totalorder %s136, %s138
      %p142 = scmp.eq.s32.totalorder %s18, 0
      %p143 = por %p141, %p142
      %p144 = scmp.ne.s32.totalorder %s136, %s138
      %p145 = scmp.eq.s32.totalorder %s23, 1
      %p146 = por %p144, %p145
      %p147 = scmp.ne.s32.totalorder %s138, %s139
      %p148 = scmp.eq.s32.totalorder %s23, 0
      %p149 = por %p147, %p148
      %p150 = scmp.ne.s32.totalorder %s138, %s139
      %p151 = scmp.eq.s32.totalorder %s24, 1
      %p152 = por %p150, %p151
      %p154 = scmp.ne.s32.totalorder %s139, %s153
      %p155 = scmp.eq.s32.totalorder %s24, 0
      %p156 = por %p154, %p155
      %s158 = sadd.s32 %s157, 1
      %p161 = scmp.eq.s32.totalorder %s18, 1
      %p162 = scmp.ne.s32.totalorder %s157, %s159
      %p163 = scmp.eq.s32.totalorder %s18, 0
      %p164 = por %p162, %p163
      %p165 = scmp.ne.s32.totalorder %s157, %s159
      %p166 = scmp.eq.s32.totalorder %s23, 1
      %p167 = por %p165, %p166
      %p168 = scmp.ne.s32.totalorder %s159, %s160
      %p169 = scmp.eq.s32.totalorder %s23, 0
      %p170 = por %p168, %p169
      %p171 = scmp.ne.s32.totalorder %s159, %s160
      %p172 = scmp.eq.s32.totalorder %s24, 1
      %p173 = por %p171, %p172
      %p175 = scmp.ne.s32.totalorder %s160, %s174
      %p176 = scmp.eq.s32.totalorder %s24, 0
      %p177 = por %p175, %p176
      %s178 = ssub.s32 %s18, %s25
      %p179 = scmp.eq.s32.totalorder %s178, 0
      %s181 = sadd.s32 %s180, 1
      %s182 = scalar_select %p179, %s180, %s181
      %p185 = pneg %p179
      %p186 = scmp.eq.s32.totalorder %s18, 1
      %p187 = por %p185, %p186
      %p188 = scmp.ne.s32.totalorder %s180, %s183
      %p189 = scmp.eq.s32.totalorder %s18, 0
      %p190 = por %p188, %p189
      %p191 = scmp.ne.s32.totalorder %s180, %s183
      %p192 = scmp.eq.s32.totalorder %s23, 1
      %p193 = por %p191, %p192
      %p194 = scmp.ne.s32.totalorder %s183, %s184
      %p195 = scmp.eq.s32.totalorder %s23, 0
      %p196 = por %p194, %p195
      %p197 = scmp.ne.s32.totalorder %s183, %s184
      %p198 = scmp.eq.s32.totalorder %s24, 1
      %p199 = por %p197, %p198
      %p201 = scmp.ne.s32.totalorder %s184, %s200
      %p202 = scmp.eq.s32.totalorder %s24, 0
      %p203 = por %p201, %p202
      %p204 = scmp.le.s32.totalorder 1, %s18
      %p205 = scmp.lt.s32.totalorder %s18, 3
      %p206 = pnand %p204, %p205
      %p207 = pneg %p206
      // Predicated region
      $region9: #{fc_network_forward.1} parent=5 // pred_check
        _
      $region10: #{fc_network_forward.1} parent=5 // pred_check_branch
        %209 = sbr.rel (%p206) target = $region12
      $region11: #{fc_network_forward.1} parent=5 // pred_region
        %s210 = ssub.s32 %s18, 1
        // Predicated region
        $region13: #{fc_network_forward.1} parent=11 // pred_check
          %p211 = pneg %p65
        $region14: #{fc_network_forward.1} parent=11 // pred_check_branch
          %213 = sbr.rel (%p211) target = $region16
        $region15: #{fc_network_forward.1} parent=11 // pred_region
          %s215 = ssub.s32 8192, 8192
          %216 = vsyncadd [#allocation5], %s215
          %s217 = sshll.u32 [#allocation4], 4
          %s218 = int_to_ptr.vmem [resolvable:$true] %s217
          %223 = dma.hbm_to_vmem [thread:$0]  %s1, 8192, %s218, [#allocation5], 128, 128, 8
        $region16: #{fc_network_forward.1} parent=11 // pred_fallthru
          _
        // Predicated region
        $region17: #{fc_network_forward.1} parent=11 // pred_check
          %p224 = pneg %p86
        $region18: #{fc_network_forward.1} parent=11 // pred_check_branch
          %226 = sbr.rel (%p224) target = $region20
        $region19: #{fc_network_forward.1} parent=11 // pred_region
          _
        $region20: #{fc_network_forward.1} parent=11 // pred_fallthru
          _
        // Predicated region
        $region21: #{fc_network_forward.1} parent=11 // pred_check
          %p227 = pneg %p107
        $region22: #{fc_network_forward.1} parent=11 // pred_check_branch
          %229 = sbr.rel (%p227) target = $region24
        $region23: #{fc_network_forward.1} parent=11 // pred_region
          %s231 = ssub.s32 2048, 2048
          %232 = vsyncadd [#allocation5], %s231
          %s233 = sshll.u32 [#allocation6], 4
          %s234 = int_to_ptr.vmem [resolvable:$true] %s233
          %239 = dma.hbm_to_vmem [thread:$0]  %s3, 2048, %s234, [#allocation5], 64, 64, 4
        $region24: #{fc_network_forward.1} parent=11 // pred_fallthru
          _
        // Predicated region
        $region25: #{fc_network_forward.1} parent=11 // pred_check
          %p240 = pneg %p128
        $region26: #{fc_network_forward.1} parent=11 // pred_check_branch
          %242 = sbr.rel (%p240) target = $region28
        $region27: #{fc_network_forward.1} parent=11 // pred_region
          _
        $region28: #{fc_network_forward.1} parent=11 // pred_fallthru
          _
        // Predicated region
        $region29: #{fc_network_forward.1} parent=11 // pred_check
          %p243 = pneg %p149
        $region30: #{fc_network_forward.1} parent=11 // pred_check_branch
          %245 = sbr.rel (%p243) target = $region32
        $region31: #{fc_network_forward.1} parent=11 // pred_region
          %s247 = ssub.s32 1024, 1024
          %248 = vsyncadd [#allocation8], %s247
          %s249 = sshll.u32 [#allocation7], 4
          %s250 = int_to_ptr.vmem [resolvable:$true] %s249
          %255 = dma.hbm_to_vmem [thread:$0]  %s5, 1024, %s250, [#allocation8], 64, 64, 4
        $region32: #{fc_network_forward.1} parent=11 // pred_fallthru
          _
        // Predicated region
        $region33: #{fc_network_forward.1} parent=11 // pred_check
          %p256 = pneg %p170
        $region34: #{fc_network_forward.1} parent=11 // pred_check_branch
          %258 = sbr.rel (%p256) target = $region36
        $region35: #{fc_network_forward.1} parent=11 // pred_region
          %s260 = ssub.s32 16, 16
          %261 = vsyncadd [#allocation8], %s260
          %s263 = sshll.u32 [#allocation9], 4
          %s264 = int_to_ptr.vmem [resolvable:$true] %s263
          %266 = dma.hbm_to_vmem [thread:$0]  %s6, 16, %s264, [#allocation8]
        $region36: #{fc_network_forward.1} parent=11 // pred_fallthru
          _
      $region12: #{fc_network_forward.1} parent=5 // pred_fallthru
        _
      %p267 = scmp.lt.s32.totalorder %s18, 2
      // Predicated region
      $region37: #{fc_network_forward.1} parent=5 // pred_check
        %p268 = pneg %p267
      $region38: #{fc_network_forward.1} parent=5 // pred_check_branch
        %270 = sbr.rel (%p268) target = $region40
      $region39: #{fc_network_forward.1} parent=5 // pred_region
        // Predicated region
        $region41: #{fc_network_forward.1} parent=39 // pred_check
          %p271 = pneg %p38
        $region42: #{fc_network_forward.1} parent=39 // pred_check_branch
          %273 = sbr.rel (%p271) target = $region44
        $region43: #{fc_network_forward.1} parent=39 // pred_region
          %s274 = sand.u32 %s28, 1
          %s275 = scalar_lea.sflag [#allocation3], %s274
          %s276 = sand.u32 %s28, 1
          %s277 = smul.addr %s276, 1024
          %s278 = scalar_lea.vmem [#allocation2], %s277
          %s279 = smul.u32 32, %s18
          %s280 = ssub.s32 38, %s279
          %p281 = scmp.lt.s32.totalorder %s280, 32
          %s282 = scalar_select %p281, %s280, 32
          %s283 = smul.u32 128, %s282
          %s284 = smul.u32 %s283, 4
          %s286 = ssub.s32 16384, %s284
          %287 = vsyncadd %s275, %s286
          %p288 = scmp.ne.s32.totalorder 0, %s284
          %s289 = smul.addr %s279, 4
          %s290 = smul.addr %s289, 128
          %s291 = scalar_lea.hbm %s0, %s290
          %s292 = smul.u32 32, %s282
          %s293 = sshll.u32 %s278, 4
          %s294 = int_to_ptr.vmem [resolvable:$true] %s293
          %s295 = sshll.u32 %s292, 4
          %299 = dma.hbm_to_vmem [thread:$0]  (%p288), %s291, %s295, %s294, %s275, 512, 512, 32
        $region44: #{fc_network_forward.1} parent=39 // pred_fallthru
          _
      $region40: #{fc_network_forward.1} parent=5 // pred_fallthru
        _
      %p300 = scmp.le.s32.totalorder 1, %s18
      %p301 = scmp.lt.s32.totalorder %s18, 3
      %p302 = pnand %p300, %p301
      %p303 = pneg %p302
      // Predicated region
      $region45: #{fc_network_forward.1} parent=5 // pred_check
        _
      $region46: #{fc_network_forward.1} parent=5 // pred_check_branch
        %305 = sbr.rel (%p302) target = $region48
      $region47: #{fc_network_forward.1} parent=5 // pred_region
        %s306 = ssub.s32 %s18, 1
        %s307 = sand.u32 %s31, 1
        %s308 = scalar_lea.sflag [#allocation3], %s307
        %s309 = sand.u32 %s31, 1
        %s310 = smul.addr %s309, 1024
        %s311 = scalar_lea.vmem [#allocation2], %s310
        // Predicated region
        $region49: #{fc_network_forward.1} parent=47 // pred_check
          %p312 = pneg %p44
        $region50: #{fc_network_forward.1} parent=47 // pred_check_branch
          %314 = sbr.rel (%p312) target = $region52
        $region51: #{fc_network_forward.1} parent=47 // pred_region
          %315 = dma.done %s308, 16384
        $region52: #{fc_network_forward.1} parent=47 // pred_fallthru
          _
        // Predicated region
        $region53: #{fc_network_forward.1} parent=47 // pred_check
          %p316 = pneg %p65
        $region54: #{fc_network_forward.1} parent=47 // pred_check_branch
          %318 = sbr.rel (%p316) target = $region56
        $region55: #{fc_network_forward.1} parent=47 // pred_region
          %319 = dma.done [#allocation5], 8192
        $region56: #{fc_network_forward.1} parent=47 // pred_fallthru
          _
        // Predicated region
        $region57: #{fc_network_forward.1} parent=47 // pred_check
          %p320 = pneg %p107
        $region58: #{fc_network_forward.1} parent=47 // pred_check_branch
          %322 = sbr.rel (%p320) target = $region60
        $region59: #{fc_network_forward.1} parent=47 // pred_region
          %323 = dma.done [#allocation5], 2048
        $region60: #{fc_network_forward.1} parent=47 // pred_fallthru
          _
        // Predicated region
        $region61: #{fc_network_forward.1} parent=47 // pred_check
          %p324 = pneg %p149
        $region62: #{fc_network_forward.1} parent=47 // pred_check_branch
          %326 = sbr.rel (%p324) target = $region64
        $region63: #{fc_network_forward.1} parent=47 // pred_region
          %327 = dma.done [#allocation8], 1024
        $region64: #{fc_network_forward.1} parent=47 // pred_fallthru
          _
        // Predicated region
        $region65: #{fc_network_forward.1} parent=47 // pred_check
          %p328 = pneg %p170
        $region66: #{fc_network_forward.1} parent=47 // pred_check_branch
          %330 = sbr.rel (%p328) target = $region68
        $region67: #{fc_network_forward.1} parent=47 // pred_region
          %331 = dma.done [#allocation8], 16
        $region68: #{fc_network_forward.1} parent=47 // pred_fallthru
          _
        %s332 = sand.u32 %s31, 1
        %s333 = scalar_lea.sflag [#allocation3], %s332
        %s334 = sand.u32 %s31, 1
        %s335 = smul.addr %s334, 1024
        %s336 = scalar_lea.vmem [#allocation2], %s335
        %p337 = pneg %p44
        %p338 = pneg %p41
        %p339 = pneg %p65
        %p340 = pneg %p62
        %p341 = pneg %p86
        %p342 = pneg %p83
        %p343 = pneg %p107
        %p344 = pneg %p104
        %p345 = pneg %p128
        %p346 = pneg %p125
        %p347 = pneg %p149
        %p348 = pneg %p146
        %p349 = pneg %p170
        %p350 = pneg %p167
        %p351 = pneg %p196
        %p352 = pneg %p193
        %s353 = sand.u32 %s183, 1
        %s354 = sand.u32 %s183, 1
        %s355 = smul.addr %s354, 128
        %s356 = scalar_lea.vmem [#allocation10], %s355
        %s357 = smul.u32 32, %s23
        %s358 = ssub.s32 38, %s357
        %p359 = scmp.lt.s32.totalorder %s358, 32
        %s360 = scalar_select %p359, %s358, 32
        %s361 = smul.u32 128, %s360
        %s362 = smul.u32 %s361, 4
        %s363 = smul.u32 32, %s23
        %s364 = ssub.s32 38, %s363
        %p365 = scmp.lt.s32.totalorder %s364, 32
        %s366 = scalar_select %p365, %s364, 32
        %s367 = smul.u32 64, %s366
        %v369 = vld [vmem:[%s311] sm:$0xff]
        %v370 = vld [vmem:[%s311 + $0x8] sm:$0xff]
        %v371 = vld [vmem:[%s311 + $0x10] sm:$0xff]
        %v372 = vld [vmem:[%s311 + $0x18] sm:$0xff]
        %v373 = vld [vmem:[%s311 + $0x20] sm:$0xff]
        %v374 = vld [vmem:[%s311 + $0x28] sm:$0xff]
        %v375 = vld [vmem:[%s311 + $0x30] sm:$0xff]
        %v376 = vld [vmem:[%s311 + $0x38] sm:$0xff]
        %v377 = vld [vmem:[%s311 + $0x40] sm:$0xff]
        %v378 = vld [vmem:[%s311 + $0x48] sm:$0xff]
        %v379 = vld [vmem:[%s311 + $0x50] sm:$0xff]
        %v380 = vld [vmem:[%s311 + $0x58] sm:$0xff]
        %v381 = vld [vmem:[%s311 + $0x60] sm:$0xff]
        %v382 = vld [vmem:[%s311 + $0x68] sm:$0xff]
        %v383 = vld [vmem:[%s311 + $0x70] sm:$0xff]
        %v384 = vld [vmem:[%s311 + $0x78] sm:$0xff]
        %v385 = vld [vmem:[%s311 + $0x80] sm:$0xff]
        %v386 = vld [vmem:[%s311 + $0x88] sm:$0xff]
        %v387 = vld [vmem:[%s311 + $0x90] sm:$0xff]
        %v388 = vld [vmem:[%s311 + $0x98] sm:$0xff]
        %v389 = vld [vmem:[%s311 + $0xa0] sm:$0xff]
        %v390 = vld [vmem:[%s311 + $0xa8] sm:$0xff]
        %v391 = vld [vmem:[%s311 + $0xb0] sm:$0xff]
        %v392 = vld [vmem:[%s311 + $0xb8] sm:$0xff]
        %v393 = vld [vmem:[%s311 + $0xc0] sm:$0xff]
        %v394 = vld [vmem:[%s311 + $0xc8] sm:$0xff]
        %v395 = vld [vmem:[%s311 + $0xd0] sm:$0xff]
        %v396 = vld [vmem:[%s311 + $0xd8] sm:$0xff]
        %v397 = vld [vmem:[%s311 + $0xe0] sm:$0xff]
        %v398 = vld [vmem:[%s311 + $0xe8] sm:$0xff]
        %v399 = vld [vmem:[%s311 + $0xf0] sm:$0xff]
        %v400 = vld [vmem:[%s311 + $0xf8] sm:$0xff]
        %v401 = vld [vmem:[%s311 + $0x100] sm:$0xff]
        %v402 = vld [vmem:[%s311 + $0x108] sm:$0xff]
        %v403 = vld [vmem:[%s311 + $0x110] sm:$0xff]
        %v404 = vld [vmem:[%s311 + $0x118] sm:$0xff]
        %v405 = vld [vmem:[%s311 + $0x120] sm:$0xff]
        %v406 = vld [vmem:[%s311 + $0x128] sm:$0xff]
        %v407 = vld [vmem:[%s311 + $0x130] sm:$0xff]
        %v408 = vld [vmem:[%s311 + $0x138] sm:$0xff]
        %v409 = vld [vmem:[%s311 + $0x140] sm:$0xff]
        %v410 = vld [vmem:[%s311 + $0x148] sm:$0xff]
        %v411 = vld [vmem:[%s311 + $0x150] sm:$0xff]
        %v412 = vld [vmem:[%s311 + $0x158] sm:$0xff]
        %v413 = vld [vmem:[%s311 + $0x160] sm:$0xff]
        %v414 = vld [vmem:[%s311 + $0x168] sm:$0xff]
        %v415 = vld [vmem:[%s311 + $0x170] sm:$0xff]
        %v416 = vld [vmem:[%s311 + $0x178] sm:$0xff]
        %v417 = vld [vmem:[%s311 + $0x180] sm:$0xff]
        %v418 = vld [vmem:[%s311 + $0x188] sm:$0xff]
        %v419 = vld [vmem:[%s311 + $0x190] sm:$0xff]
        %v420 = vld [vmem:[%s311 + $0x198] sm:$0xff]
        %v421 = vld [vmem:[%s311 + $0x1a0] sm:$0xff]
        %v422 = vld [vmem:[%s311 + $0x1a8] sm:$0xff]
        %v423 = vld [vmem:[%s311 + $0x1b0] sm:$0xff]
        %v424 = vld [vmem:[%s311 + $0x1b8] sm:$0xff]
        %v425 = vld [vmem:[%s311 + $0x1c0] sm:$0xff]
        %v426 = vld [vmem:[%s311 + $0x1c8] sm:$0xff]
        %v427 = vld [vmem:[%s311 + $0x1d0] sm:$0xff]
        %v428 = vld [vmem:[%s311 + $0x1d8] sm:$0xff]
        %v429 = vld [vmem:[%s311 + $0x1e0] sm:$0xff]
        %v430 = vld [vmem:[%s311 + $0x1e8] sm:$0xff]
        %v431 = vld [vmem:[%s311 + $0x1f0] sm:$0xff]
        %v432 = vld [vmem:[%s311 + $0x1f8] sm:$0xff]
        %v433 = vld [vmem:[%s311 + $0x200] sm:$0xff]
        %v434 = vld [vmem:[%s311 + $0x208] sm:$0xff]
        %v435 = vld [vmem:[%s311 + $0x210] sm:$0xff]
        %v436 = vld [vmem:[%s311 + $0x218] sm:$0xff]
        %v437 = vld [vmem:[%s311 + $0x220] sm:$0xff]
        %v438 = vld [vmem:[%s311 + $0x228] sm:$0xff]
        %v439 = vld [vmem:[%s311 + $0x230] sm:$0xff]
        %v440 = vld [vmem:[%s311 + $0x238] sm:$0xff]
        %v441 = vld [vmem:[%s311 + $0x240] sm:$0xff]
        %v442 = vld [vmem:[%s311 + $0x248] sm:$0xff]
        %v443 = vld [vmem:[%s311 + $0x250] sm:$0xff]
        %v444 = vld [vmem:[%s311 + $0x258] sm:$0xff]
        %v445 = vld [vmem:[%s311 + $0x260] sm:$0xff]
        %v446 = vld [vmem:[%s311 + $0x268] sm:$0xff]
        %v447 = vld [vmem:[%s311 + $0x270] sm:$0xff]
        %v448 = vld [vmem:[%s311 + $0x278] sm:$0xff]
        %v449 = vld [vmem:[%s311 + $0x280] sm:$0xff]
        %v450 = vld [vmem:[%s311 + $0x288] sm:$0xff]
        %v451 = vld [vmem:[%s311 + $0x290] sm:$0xff]
        %v452 = vld [vmem:[%s311 + $0x298] sm:$0xff]
        %v453 = vld [vmem:[%s311 + $0x2a0] sm:$0xff]
        %v454 = vld [vmem:[%s311 + $0x2a8] sm:$0xff]
        %v455 = vld [vmem:[%s311 + $0x2b0] sm:$0xff]
        %v456 = vld [vmem:[%s311 + $0x2b8] sm:$0xff]
        %v457 = vld [vmem:[%s311 + $0x2c0] sm:$0xff]
        %v458 = vld [vmem:[%s311 + $0x2c8] sm:$0xff]
        %v459 = vld [vmem:[%s311 + $0x2d0] sm:$0xff]
        %v460 = vld [vmem:[%s311 + $0x2d8] sm:$0xff]
        %v461 = vld [vmem:[%s311 + $0x2e0] sm:$0xff]
        %v462 = vld [vmem:[%s311 + $0x2e8] sm:$0xff]
        %v463 = vld [vmem:[%s311 + $0x2f0] sm:$0xff]
        %v464 = vld [vmem:[%s311 + $0x2f8] sm:$0xff]
        %v465 = vld [vmem:[%s311 + $0x300] sm:$0xff]
        %v466 = vld [vmem:[%s311 + $0x308] sm:$0xff]
        %v467 = vld [vmem:[%s311 + $0x310] sm:$0xff]
        %v468 = vld [vmem:[%s311 + $0x318] sm:$0xff]
        %v469 = vld [vmem:[%s311 + $0x320] sm:$0xff]
        %v470 = vld [vmem:[%s311 + $0x328] sm:$0xff]
        %v471 = vld [vmem:[%s311 + $0x330] sm:$0xff]
        %v472 = vld [vmem:[%s311 + $0x338] sm:$0xff]
        %v473 = vld [vmem:[%s311 + $0x340] sm:$0xff]
        %v474 = vld [vmem:[%s311 + $0x348] sm:$0xff]
        %v475 = vld [vmem:[%s311 + $0x350] sm:$0xff]
        %v476 = vld [vmem:[%s311 + $0x358] sm:$0xff]
        %v477 = vld [vmem:[%s311 + $0x360] sm:$0xff]
        %v478 = vld [vmem:[%s311 + $0x368] sm:$0xff]
        %v479 = vld [vmem:[%s311 + $0x370] sm:$0xff]
        %v480 = vld [vmem:[%s311 + $0x378] sm:$0xff]
        %v481 = vld [vmem:[%s311 + $0x380] sm:$0xff]
        %v482 = vld [vmem:[%s311 + $0x388] sm:$0xff]
        %v483 = vld [vmem:[%s311 + $0x390] sm:$0xff]
        %v484 = vld [vmem:[%s311 + $0x398] sm:$0xff]
        %v485 = vld [vmem:[%s311 + $0x3a0] sm:$0xff]
        %v486 = vld [vmem:[%s311 + $0x3a8] sm:$0xff]
        %v487 = vld [vmem:[%s311 + $0x3b0] sm:$0xff]
        %v488 = vld [vmem:[%s311 + $0x3b8] sm:$0xff]
        %v489 = vld [vmem:[%s311 + $0x3c0] sm:$0xff]
        %v490 = vld [vmem:[%s311 + $0x3c8] sm:$0xff]
        %v491 = vld [vmem:[%s311 + $0x3d0] sm:$0xff]
        %v492 = vld [vmem:[%s311 + $0x3d8] sm:$0xff]
        %v493 = vld [vmem:[%s311 + $0x3e0] sm:$0xff]
        %v494 = vld [vmem:[%s311 + $0x3e8] sm:$0xff]
        %v495 = vld [vmem:[%s311 + $0x3f0] sm:$0xff]
        %v496 = vld [vmem:[%s311 + $0x3f8] sm:$0xff]
        %v497 = vpack.c.bf16 %v373, %v369
        %v498 = vpack.c.bf16 %v374, %v370
        %v499 = vpack.c.bf16 %v375, %v371
        %v500 = vpack.c.bf16 %v376, %v372
        %v501 = vpack.c.bf16 %v381, %v377
        %v502 = vpack.c.bf16 %v382, %v378
        %v503 = vpack.c.bf16 %v383, %v379
        %v504 = vpack.c.bf16 %v384, %v380
        %v505 = vpack.c.bf16 %v389, %v385
        %v506 = vpack.c.bf16 %v390, %v386
        %v507 = vpack.c.bf16 %v391, %v387
        %v508 = vpack.c.bf16 %v392, %v388
        %v509 = vpack.c.bf16 %v397, %v393
        %v510 = vpack.c.bf16 %v398, %v394
        %v511 = vpack.c.bf16 %v399, %v395
        %v512 = vpack.c.bf16 %v400, %v396
        %v513 = vpack.c.bf16 %v405, %v401
        %v514 = vpack.c.bf16 %v406, %v402
        %v515 = vpack.c.bf16 %v407, %v403
        %v516 = vpack.c.bf16 %v408, %v404
        %v517 = vpack.c.bf16 %v413, %v409
        %v518 = vpack.c.bf16 %v414, %v410
        %v519 = vpack.c.bf16 %v415, %v411
        %v520 = vpack.c.bf16 %v416, %v412
        %v521 = vpack.c.bf16 %v421, %v417
        %v522 = vpack.c.bf16 %v422, %v418
        %v523 = vpack.c.bf16 %v423, %v419
        %v524 = vpack.c.bf16 %v424, %v420
        %v525 = vpack.c.bf16 %v429, %v425
        %v526 = vpack.c.bf16 %v430, %v426
        %v527 = vpack.c.bf16 %v431, %v427
        %v528 = vpack.c.bf16 %v432, %v428
        %v529 = vpack.c.bf16 %v437, %v433
        %v530 = vpack.c.bf16 %v438, %v434
        %v531 = vpack.c.bf16 %v439, %v435
        %v532 = vpack.c.bf16 %v440, %v436
        %v533 = vpack.c.bf16 %v445, %v441
        %v534 = vpack.c.bf16 %v446, %v442
        %v535 = vpack.c.bf16 %v447, %v443
        %v536 = vpack.c.bf16 %v448, %v444
        %v537 = vpack.c.bf16 %v453, %v449
        %v538 = vpack.c.bf16 %v454, %v450
        %v539 = vpack.c.bf16 %v455, %v451
        %v540 = vpack.c.bf16 %v456, %v452
        %v541 = vpack.c.bf16 %v461, %v457
        %v542 = vpack.c.bf16 %v462, %v458
        %v543 = vpack.c.bf16 %v463, %v459
        %v544 = vpack.c.bf16 %v464, %v460
        %v545 = vpack.c.bf16 %v469, %v465
        %v546 = vpack.c.bf16 %v470, %v466
        %v547 = vpack.c.bf16 %v471, %v467
        %v548 = vpack.c.bf16 %v472, %v468
        %v549 = vpack.c.bf16 %v477, %v473
        %v550 = vpack.c.bf16 %v478, %v474
        %v551 = vpack.c.bf16 %v479, %v475
        %v552 = vpack.c.bf16 %v480, %v476
        %v553 = vpack.c.bf16 %v485, %v481
        %v554 = vpack.c.bf16 %v486, %v482
        %v555 = vpack.c.bf16 %v487, %v483
        %v556 = vpack.c.bf16 %v488, %v484
        %v557 = vpack.c.bf16 %v493, %v489
        %v558 = vpack.c.bf16 %v494, %v490
        %v559 = vpack.c.bf16 %v495, %v491
        %v560 = vpack.c.bf16 %v496, %v492
        %v561 = vld [vmem:[#allocation4] sm:$0xff]
        %v562 = vld [vmem:[#allocation4 + $0x8] sm:$0xff]
        %v563 = vld [vmem:[#allocation4 + $0x10] sm:$0xff]
        %v564 = vld [vmem:[#allocation4 + $0x18] sm:$0xff]
        %v565 = vld [vmem:[#allocation4 + $0x20] sm:$0xff]
        %v566 = vld [vmem:[#allocation4 + $0x28] sm:$0xff]
        %v567 = vld [vmem:[#allocation4 + $0x30] sm:$0xff]
        %v568 = vld [vmem:[#allocation4 + $0x38] sm:$0xff]
        %v569 = vld [vmem:[#allocation4 + $0x40] sm:$0xff]
        %v570 = vld [vmem:[#allocation4 + $0x48] sm:$0xff]
        %v571 = vld [vmem:[#allocation4 + $0x50] sm:$0xff]
        %v572 = vld [vmem:[#allocation4 + $0x58] sm:$0xff]
        %v573 = vld [vmem:[#allocation4 + $0x60] sm:$0xff]
        %v574 = vld [vmem:[#allocation4 + $0x68] sm:$0xff]
        %v575 = vld [vmem:[#allocation4 + $0x70] sm:$0xff]
        %v576 = vld [vmem:[#allocation4 + $0x78] sm:$0xff]
        %v577 = vld [vmem:[#allocation4 + $0x80] sm:$0xff]
        %v578 = vld [vmem:[#allocation4 + $0x88] sm:$0xff]
        %v579 = vld [vmem:[#allocation4 + $0x90] sm:$0xff]
        %v580 = vld [vmem:[#allocation4 + $0x98] sm:$0xff]
        %v581 = vld [vmem:[#allocation4 + $0xa0] sm:$0xff]
        %v582 = vld [vmem:[#allocation4 + $0xa8] sm:$0xff]
        %v583 = vld [vmem:[#allocation4 + $0xb0] sm:$0xff]
        %v584 = vld [vmem:[#allocation4 + $0xb8] sm:$0xff]
        %v585 = vld [vmem:[#allocation4 + $0xc0] sm:$0xff]
        %v586 = vld [vmem:[#allocation4 + $0xc8] sm:$0xff]
        %v587 = vld [vmem:[#allocation4 + $0xd0] sm:$0xff]
        %v588 = vld [vmem:[#allocation4 + $0xd8] sm:$0xff]
        %v589 = vld [vmem:[#allocation4 + $0xe0] sm:$0xff]
        %v590 = vld [vmem:[#allocation4 + $0xe8] sm:$0xff]
        %v591 = vld [vmem:[#allocation4 + $0xf0] sm:$0xff]
        %v592 = vld [vmem:[#allocation4 + $0xf8] sm:$0xff]
        %v593 = vld [vmem:[#allocation4 + $0x100] sm:$0xff]
        %v594 = vld [vmem:[#allocation4 + $0x108] sm:$0xff]
        %v595 = vld [vmem:[#allocation4 + $0x110] sm:$0xff]
        %v596 = vld [vmem:[#allocation4 + $0x118] sm:$0xff]
        %v597 = vld [vmem:[#allocation4 + $0x120] sm:$0xff]
        %v598 = vld [vmem:[#allocation4 + $0x128] sm:$0xff]
        %v599 = vld [vmem:[#allocation4 + $0x130] sm:$0xff]
        %v600 = vld [vmem:[#allocation4 + $0x138] sm:$0xff]
        %v601 = vld [vmem:[#allocation4 + $0x140] sm:$0xff]
        %v602 = vld [vmem:[#allocation4 + $0x148] sm:$0xff]
        %v603 = vld [vmem:[#allocation4 + $0x150] sm:$0xff]
        %v604 = vld [vmem:[#allocation4 + $0x158] sm:$0xff]
        %v605 = vld [vmem:[#allocation4 + $0x160] sm:$0xff]
        %v606 = vld [vmem:[#allocation4 + $0x168] sm:$0xff]
        %v607 = vld [vmem:[#allocation4 + $0x170] sm:$0xff]
        %v608 = vld [vmem:[#allocation4 + $0x178] sm:$0xff]
        %v609 = vld [vmem:[#allocation4 + $0x180] sm:$0xff]
        %v610 = vld [vmem:[#allocation4 + $0x188] sm:$0xff]
        %v611 = vld [vmem:[#allocation4 + $0x190] sm:$0xff]
        %v612 = vld [vmem:[#allocation4 + $0x198] sm:$0xff]
        %v613 = vld [vmem:[#allocation4 + $0x1a0] sm:$0xff]
        %v614 = vld [vmem:[#allocation4 + $0x1a8] sm:$0xff]
        %v615 = vld [vmem:[#allocation4 + $0x1b0] sm:$0xff]
        %v616 = vld [vmem:[#allocation4 + $0x1b8] sm:$0xff]
        %v617 = vld [vmem:[#allocation4 + $0x1c0] sm:$0xff]
        %v618 = vld [vmem:[#allocation4 + $0x1c8] sm:$0xff]
        %v619 = vld [vmem:[#allocation4 + $0x1d0] sm:$0xff]
        %v620 = vld [vmem:[#allocation4 + $0x1d8] sm:$0xff]
        %v621 = vld [vmem:[#allocation4 + $0x1e0] sm:$0xff]
        %v622 = vld [vmem:[#allocation4 + $0x1e8] sm:$0xff]
        %v623 = vld [vmem:[#allocation4 + $0x1f0] sm:$0xff]
        %v624 = vld [vmem:[#allocation4 + $0x1f8] sm:$0xff]
        %v625 = vld [vmem:[%s2] sm:$0x3]
        %v627 = vlaneseq
        %v628 = vshrl.u32 %v627, 7
        %v629 = vsub.s32 0, %v628
        %v630 = vrot.slane %v625, %v629
        %v631 = vlaneseq
        %v632 = vshrl.u32 %v631, 7
        %v633 = vsub.s32 1, %v632
        %v634 = vrot.slane %v625, %v633
        %v701 = vunpack.c.l.b16 %v561
        %v702 = vunpack.c.h.b16 %v561
        %v703 = vunpack.c.l.b16 %v562
        %v704 = vunpack.c.h.b16 %v562
        %v705 = vunpack.c.l.b16 %v563
        %v706 = vunpack.c.h.b16 %v563
        %v707 = vunpack.c.l.b16 %v564
        %v708 = vunpack.c.h.b16 %v564
        %v709 = vunpack.c.l.b16 %v565
        %v710 = vunpack.c.h.b16 %v565
        %v711 = vunpack.c.l.b16 %v566
        %v712 = vunpack.c.h.b16 %v566
        %v713 = vunpack.c.l.b16 %v567
        %v714 = vunpack.c.h.b16 %v567
        %v715 = vunpack.c.l.b16 %v568
        %v716 = vunpack.c.h.b16 %v568
        %v717 = vunpack.c.l.b16 %v569
        %v718 = vunpack.c.h.b16 %v569
        %v719 = vunpack.c.l.b16 %v570
        %v720 = vunpack.c.h.b16 %v570
        %v721 = vunpack.c.l.b16 %v571
        %v722 = vunpack.c.h.b16 %v571
        %v723 = vunpack.c.l.b16 %v572
        %v724 = vunpack.c.h.b16 %v572
        %v725 = vunpack.c.l.b16 %v573
        %v726 = vunpack.c.h.b16 %v573
        %v727 = vunpack.c.l.b16 %v574
        %v728 = vunpack.c.h.b16 %v574
        %v729 = vunpack.c.l.b16 %v575
        %v730 = vunpack.c.h.b16 %v575
        %v731 = vunpack.c.l.b16 %v576
        %v732 = vunpack.c.h.b16 %v576
        %v733 = vunpack.c.l.b16 %v577
        %v734 = vunpack.c.h.b16 %v577
        %v735 = vunpack.c.l.b16 %v578
        %v736 = vunpack.c.h.b16 %v578
        %v737 = vunpack.c.l.b16 %v579
        %v738 = vunpack.c.h.b16 %v579
        %v739 = vunpack.c.l.b16 %v580
        %v740 = vunpack.c.h.b16 %v580
        %v741 = vunpack.c.l.b16 %v581
        %v742 = vunpack.c.h.b16 %v581
        %v743 = vunpack.c.l.b16 %v582
        %v744 = vunpack.c.h.b16 %v582
        %v745 = vunpack.c.l.b16 %v583
        %v746 = vunpack.c.h.b16 %v583
        %v747 = vunpack.c.l.b16 %v584
        %v748 = vunpack.c.h.b16 %v584
        %v749 = vunpack.c.l.b16 %v585
        %v750 = vunpack.c.h.b16 %v585
        %v751 = vunpack.c.l.b16 %v586
        %v752 = vunpack.c.h.b16 %v586
        %v753 = vunpack.c.l.b16 %v587
        %v754 = vunpack.c.h.b16 %v587
        %v755 = vunpack.c.l.b16 %v588
        %v756 = vunpack.c.h.b16 %v588
        %v757 = vunpack.c.l.b16 %v589
        %v758 = vunpack.c.h.b16 %v589
        %v759 = vunpack.c.l.b16 %v590
        %v760 = vunpack.c.h.b16 %v590
        %v761 = vunpack.c.l.b16 %v591
        %v762 = vunpack.c.h.b16 %v591
        %v763 = vunpack.c.l.b16 %v592
        %v764 = vunpack.c.h.b16 %v592
        %v765 = vunpack.c.l.b16 %v593
        %v766 = vunpack.c.h.b16 %v593
        %v767 = vunpack.c.l.b16 %v594
        %v768 = vunpack.c.h.b16 %v594
        %v769 = vunpack.c.l.b16 %v595
        %v770 = vunpack.c.h.b16 %v595
        %v771 = vunpack.c.l.b16 %v596
        %v772 = vunpack.c.h.b16 %v596
        %v773 = vunpack.c.l.b16 %v597
        %v774 = vunpack.c.h.b16 %v597
        %v775 = vunpack.c.l.b16 %v598
        %v776 = vunpack.c.h.b16 %v598
        %v777 = vunpack.c.l.b16 %v599
        %v778 = vunpack.c.h.b16 %v599
        %v779 = vunpack.c.l.b16 %v600
        %v780 = vunpack.c.h.b16 %v600
        %v781 = vunpack.c.l.b16 %v601
        %v782 = vunpack.c.h.b16 %v601
        %v783 = vunpack.c.l.b16 %v602
        %v784 = vunpack.c.h.b16 %v602
        %v785 = vunpack.c.l.b16 %v603
        %v786 = vunpack.c.h.b16 %v603
        %v787 = vunpack.c.l.b16 %v604
        %v788 = vunpack.c.h.b16 %v604
        %v789 = vunpack.c.l.b16 %v605
        %v790 = vunpack.c.h.b16 %v605
        %v791 = vunpack.c.l.b16 %v606
        %v792 = vunpack.c.h.b16 %v606
        %v793 = vunpack.c.l.b16 %v607
        %v794 = vunpack.c.h.b16 %v607
        %v795 = vunpack.c.l.b16 %v608
        %v796 = vunpack.c.h.b16 %v608
        %v797 = vunpack.c.l.b16 %v609
        %v798 = vunpack.c.h.b16 %v609
        %v799 = vunpack.c.l.b16 %v610
        %v800 = vunpack.c.h.b16 %v610
        %v801 = vunpack.c.l.b16 %v611
        %v802 = vunpack.c.h.b16 %v611
        %v803 = vunpack.c.l.b16 %v612
        %v804 = vunpack.c.h.b16 %v612
        %v805 = vunpack.c.l.b16 %v613
        %v806 = vunpack.c.h.b16 %v613
        %v807 = vunpack.c.l.b16 %v614
        %v808 = vunpack.c.h.b16 %v614
        %v809 = vunpack.c.l.b16 %v615
        %v810 = vunpack.c.h.b16 %v615
        %v811 = vunpack.c.l.b16 %v616
        %v812 = vunpack.c.h.b16 %v616
        %v813 = vunpack.c.l.b16 %v617
        %v814 = vunpack.c.h.b16 %v617
        %v815 = vunpack.c.l.b16 %v618
        %v816 = vunpack.c.h.b16 %v618
        %v817 = vunpack.c.l.b16 %v619
        %v818 = vunpack.c.h.b16 %v619
        %v819 = vunpack.c.l.b16 %v620
        %v820 = vunpack.c.h.b16 %v620
        %v821 = vunpack.c.l.b16 %v621
        %v822 = vunpack.c.h.b16 %v621
        %v823 = vunpack.c.l.b16 %v622
        %v824 = vunpack.c.h.b16 %v622
        %v825 = vunpack.c.l.b16 %v623
        %v826 = vunpack.c.h.b16 %v623
        %v827 = vunpack.c.l.b16 %v624
        %v828 = vunpack.c.h.b16 %v624
        %v829 = vpack.c.b16 %v703, %v701
        %v830 = vpack.c.b16 %v704, %v702
        %v831 = vpack.c.b16 %v707, %v705
        %v832 = vpack.c.b16 %v708, %v706
        %v833 = vpack.c.b16 %v711, %v709
        %v834 = vpack.c.b16 %v712, %v710
        %v835 = vpack.c.b16 %v715, %v713
        %v836 = vpack.c.b16 %v716, %v714
        %v837 = vpack.c.b16 %v719, %v717
        %v838 = vpack.c.b16 %v720, %v718
        %v839 = vpack.c.b16 %v723, %v721
        %v840 = vpack.c.b16 %v724, %v722
        %v841 = vpack.c.b16 %v727, %v725
        %v842 = vpack.c.b16 %v728, %v726
        %v843 = vpack.c.b16 %v731, %v729
        %v844 = vpack.c.b16 %v732, %v730
        %v845 = vpack.c.b16 %v735, %v733
        %v846 = vpack.c.b16 %v736, %v734
        %v847 = vpack.c.b16 %v739, %v737
        %v848 = vpack.c.b16 %v740, %v738
        %v849 = vpack.c.b16 %v743, %v741
        %v850 = vpack.c.b16 %v744, %v742
        %v851 = vpack.c.b16 %v747, %v745
        %v852 = vpack.c.b16 %v748, %v746
        %v853 = vpack.c.b16 %v751, %v749
        %v854 = vpack.c.b16 %v752, %v750
        %v855 = vpack.c.b16 %v755, %v753
        %v856 = vpack.c.b16 %v756, %v754
        %v857 = vpack.c.b16 %v759, %v757
        %v858 = vpack.c.b16 %v760, %v758
        %v859 = vpack.c.b16 %v763, %v761
        %v860 = vpack.c.b16 %v764, %v762
        %v861 = vpack.c.b16 %v767, %v765
        %v862 = vpack.c.b16 %v768, %v766
        %v863 = vpack.c.b16 %v771, %v769
        %v864 = vpack.c.b16 %v772, %v770
        %v865 = vpack.c.b16 %v775, %v773
        %v866 = vpack.c.b16 %v776, %v774
        %v867 = vpack.c.b16 %v779, %v777
        %v868 = vpack.c.b16 %v780, %v778
        %v869 = vpack.c.b16 %v783, %v781
        %v870 = vpack.c.b16 %v784, %v782
        %v871 = vpack.c.b16 %v787, %v785
        %v872 = vpack.c.b16 %v788, %v786
        %v873 = vpack.c.b16 %v791, %v789
        %v874 = vpack.c.b16 %v792, %v790
        %v875 = vpack.c.b16 %v795, %v793
        %v876 = vpack.c.b16 %v796, %v794
        %v877 = vpack.c.b16 %v799, %v797
        %v878 = vpack.c.b16 %v800, %v798
        %v879 = vpack.c.b16 %v803, %v801
        %v880 = vpack.c.b16 %v804, %v802
        %v881 = vpack.c.b16 %v807, %v805
        %v882 = vpack.c.b16 %v808, %v806
        %v883 = vpack.c.b16 %v811, %v809
        %v884 = vpack.c.b16 %v812, %v810
        %v885 = vpack.c.b16 %v815, %v813
        %v886 = vpack.c.b16 %v816, %v814
        %v887 = vpack.c.b16 %v819, %v817
        %v888 = vpack.c.b16 %v820, %v818
        %v889 = vpack.c.b16 %v823, %v821
        %v890 = vpack.c.b16 %v824, %v822
        %v891 = vpack.c.b16 %v827, %v825
        %v892 = vpack.c.b16 %v828, %v826
        %957 = vmatprep.subr.bf16.mxu0 %v830
        %958 = vmatpush1.bf16.msra.mxu0 %v829
        %959 = vmatprep.subr.bf16.mxu0 %v832
        %960 = vmatpush1.bf16.msra.mxu0 %v831
        %961 = vmatprep.subr.bf16.mxu0 %v834
        %962 = vmatpush1.bf16.msra.mxu0 %v833
        %963 = vmatprep.subr.bf16.mxu0 %v836
        %964 = vmatpush1.bf16.msra.mxu0 %v835
        %965 = vmatprep.subr.bf16.mxu0 %v838
        %966 = vmatpush1.bf16.msra.mxu0 %v837
        %967 = vmatprep.subr.bf16.mxu0 %v840
        %968 = vmatpush1.bf16.msra.mxu0 %v839
        %969 = vmatprep.subr.bf16.mxu0 %v842
        %970 = vmatpush1.bf16.msra.mxu0 %v841
        %971 = vmatprep.subr.bf16.mxu0 %v844
        %972 = vmatpush1.bf16.msra.mxu0 %v843
        %973 = vmatprep.subr.bf16.mxu0 %v846
        %974 = vmatpush1.bf16.msra.mxu0 %v845
        %975 = vmatprep.subr.bf16.mxu0 %v848
        %976 = vmatpush1.bf16.msra.mxu0 %v847
        %977 = vmatprep.subr.bf16.mxu0 %v850
        %978 = vmatpush1.bf16.msra.mxu0 %v849
        %979 = vmatprep.subr.bf16.mxu0 %v852
        %980 = vmatpush1.bf16.msra.mxu0 %v851
        %981 = vmatprep.subr.bf16.mxu0 %v854
        %982 = vmatpush1.bf16.msra.mxu0 %v853
        %983 = vmatprep.subr.bf16.mxu0 %v856
        %984 = vmatpush1.bf16.msra.mxu0 %v855
        %985 = vmatprep.subr.bf16.mxu0 %v858
        %986 = vmatpush1.bf16.msra.mxu0 %v857
        %987 = vmatprep.subr.bf16.mxu0 %v860
        %988 = vmatpush1.bf16.msra.mxu0 %v859
        %989 = vmatprep.mubr.bf16.mxu0 %v498
        %990 = vmatmul.mubr.bf16.gmra.mrb[0].mxu0 %v497
        %v991 = vpop.f32.mrb[0].mxu0
        %v992 = vadd.f32 %v630, %v991
        %v993 = vpop.f32.mrb[0].mxu0
        %v994 = vadd.f32 %v634, %v993
        %v995 = vpop.f32.mrb[0].mxu0
        %v996 = vadd.f32 %v630, %v995
        %v997 = vpop.f32.mrb[0].mxu0
        %v998 = vadd.f32 %v634, %v997
        %999 = vmatprep.mubr.bf16.mxu0 %v502
        %1000 = vmatmul.mubr.bf16.gmra.mrb[0].mxu0 %v501
        %v1001 = vpop.f32.mrb[0].mxu0
        %v1002 = vadd.f32 %v630, %v1001
        %v1003 = vpop.f32.mrb[0].mxu0
        %v1004 = vadd.f32 %v634, %v1003
        %v1005 = vpop.f32.mrb[0].mxu0
        %v1006 = vadd.f32 %v630, %v1005
        %v1007 = vpop.f32.mrb[0].mxu0
        %v1008 = vadd.f32 %v634, %v1007
        %1009 = vmatprep.mubr.bf16.mxu0 %v506
        %1010 = vmatmul.mubr.bf16.gmra.mrb[0].mxu0 %v505
        %v1011 = vpop.f32.mrb[0].mxu0
        %v1012 = vadd.f32 %v630, %v1011
        %v1013 = vpop.f32.mrb[0].mxu0
        %v1014 = vadd.f32 %v634, %v1013
        %v1015 = vpop.f32.mrb[0].mxu0
        %v1016 = vadd.f32 %v630, %v1015
        %v1017 = vpop.f32.mrb[0].mxu0
        %v1018 = vadd.f32 %v634, %v1017
        %1019 = vmatprep.mubr.bf16.mxu0 %v510
        %1020 = vmatmul.mubr.bf16.gmra.mrb[0].mxu0 %v509
        %v1021 = vpop.f32.mrb[0].mxu0
        %v1022 = vadd.f32 %v630, %v1021
        %v1023 = vpop.f32.mrb[0].mxu0
        %v1024 = vadd.f32 %v634, %v1023
        %v1025 = vpop.f32.mrb[0].mxu0
        %v1026 = vadd.f32 %v630, %v1025
        %v1027 = vpop.f32.mrb[0].mxu0
        %v1028 = vadd.f32 %v634, %v1027
        %1029 = vmatprep.mubr.bf16.mxu0 %v514
        %1030 = vmatmul.mubr.bf16.gmra.mrb[0].mxu0 %v513
        %v1031 = vpop.f32.mrb[0].mxu0
        %v1032 = vadd.f32 %v630, %v1031
        %v1033 = vpop.f32.mrb[0].mxu0
        %v1034 = vadd.f32 %v634, %v1033
        %v1035 = vpop.f32.mrb[0].mxu0
        %v1036 = vadd.f32 %v630, %v1035
        %v1037 = vpop.f32.mrb[0].mxu0
        %v1038 = vadd.f32 %v634, %v1037
        %1039 = vmatprep.mubr.bf16.mxu0 %v518
        %1040 = vmatmul.mubr.bf16.gmra.mrb[0].mxu0 %v517
        %v1041 = vpop.f32.mrb[0].mxu0
        %v1042 = vadd.f32 %v630, %v1041
        %v1043 = vpop.f32.mrb[0].mxu0
        %v1044 = vadd.f32 %v634, %v1043
        %v1045 = vpop.f32.mrb[0].mxu0
        %v1046 = vadd.f32 %v630, %v1045
        %v1047 = vpop.f32.mrb[0].mxu0
        %v1048 = vadd.f32 %v634, %v1047
        %1049 = vmatprep.mubr.bf16.mxu0 %v522
        %1050 = vmatmul.mubr.bf16.gmra.mrb[0].mxu0 %v521
        %v1051 = vpop.f32.mrb[0].mxu0
        %v1052 = vadd.f32 %v630, %v1051
        %v1053 = vpop.f32.mrb[0].mxu0
        %v1054 = vadd.f32 %v634, %v1053
        %v1055 = vpop.f32.mrb[0].mxu0
        %v1056 = vadd.f32 %v630, %v1055
        %v1057 = vpop.f32.mrb[0].mxu0
        %v1058 = vadd.f32 %v634, %v1057
        %1059 = vmatprep.mubr.bf16.mxu0 %v526
        %1060 = vmatmul.mubr.bf16.gmra.mrb[0].mxu0 %v525
        %v1061 = vpop.f32.mrb[0].mxu0
        %v1062 = vadd.f32 %v630, %v1061
        %v1063 = vpop.f32.mrb[0].mxu0
        %v1064 = vadd.f32 %v634, %v1063
        %v1065 = vpop.f32.mrb[0].mxu0
        %v1066 = vadd.f32 %v630, %v1065
        %v1067 = vpop.f32.mrb[0].mxu0
        %v1068 = vadd.f32 %v634, %v1067
        %1069 = vmatprep.mubr.bf16.mxu0 %v530
        %1070 = vmatmul.mubr.bf16.gmra.mrb[0].mxu0 %v529
        %v1071 = vpop.f32.mrb[0].mxu0
        %v1072 = vadd.f32 %v630, %v1071
        %v1073 = vpop.f32.mrb[0].mxu0
        %v1074 = vadd.f32 %v634, %v1073
        %v1075 = vpop.f32.mrb[0].mxu0
        %v1076 = vadd.f32 %v630, %v1075
        %v1077 = vpop.f32.mrb[0].mxu0
        %v1078 = vadd.f32 %v634, %v1077
        %1079 = vmatprep.mubr.bf16.mxu0 %v534
        %1080 = vmatmul.mubr.bf16.gmra.mrb[0].mxu0 %v533
        %v1081 = vpop.f32.mrb[0].mxu0
        %v1082 = vadd.f32 %v630, %v1081
        %v1083 = vpop.f32.mrb[0].mxu0
        %v1084 = vadd.f32 %v634, %v1083
        %v1085 = vpop.f32.mrb[0].mxu0
        %v1086 = vadd.f32 %v630, %v1085
        %v1087 = vpop.f32.mrb[0].mxu0
        %v1088 = vadd.f32 %v634, %v1087
        %1089 = vmatprep.mubr.bf16.mxu0 %v538
        %1090 = vmatmul.mubr.bf16.gmra.mrb[0].mxu0 %v537
        %v1091 = vpop.f32.mrb[0].mxu0
        %v1092 = vadd.f32 %v630, %v1091
        %v1093 = vpop.f32.mrb[0].mxu0
        %v1094 = vadd.f32 %v634, %v1093
        %v1095 = vpop.f32.mrb[0].mxu0
        %v1096 = vadd.f32 %v630, %v1095
        %v1097 = vpop.f32.mrb[0].mxu0
        %v1098 = vadd.f32 %v634, %v1097
        %1099 = vmatprep.mubr.bf16.mxu0 %v542
        %1100 = vmatmul.mubr.bf16.gmra.mrb[0].mxu0 %v541
        %v1101 = vpop.f32.mrb[0].mxu0
        %v1102 = vadd.f32 %v630, %v1101
        %v1103 = vpop.f32.mrb[0].mxu0
        %v1104 = vadd.f32 %v634, %v1103
        %v1105 = vpop.f32.mrb[0].mxu0
        %v1106 = vadd.f32 %v630, %v1105
        %v1107 = vpop.f32.mrb[0].mxu0
        %v1108 = vadd.f32 %v634, %v1107
        %1109 = vmatprep.mubr.bf16.mxu0 %v546
        %1110 = vmatmul.mubr.bf16.gmra.mrb[0].mxu0 %v545
        %v1111 = vpop.f32.mrb[0].mxu0
        %v1112 = vadd.f32 %v630, %v1111
        %v1113 = vpop.f32.mrb[0].mxu0
        %v1114 = vadd.f32 %v634, %v1113
        %v1115 = vpop.f32.mrb[0].mxu0
        %v1116 = vadd.f32 %v630, %v1115
        %v1117 = vpop.f32.mrb[0].mxu0
        %v1118 = vadd.f32 %v634, %v1117
        %1119 = vmatprep.mubr.bf16.mxu0 %v550
        %1120 = vmatmul.mubr.bf16.gmra.mrb[0].mxu0 %v549
        %v1121 = vpop.f32.mrb[0].mxu0
        %v1122 = vadd.f32 %v630, %v1121
        %v1123 = vpop.f32.mrb[0].mxu0
        %v1124 = vadd.f32 %v634, %v1123
        %v1125 = vpop.f32.mrb[0].mxu0
        %v1126 = vadd.f32 %v630, %v1125
        %v1127 = vpop.f32.mrb[0].mxu0
        %v1128 = vadd.f32 %v634, %v1127
        %1129 = vmatprep.mubr.bf16.mxu0 %v554
        %1130 = vmatmul.mubr.bf16.gmra.mrb[0].mxu0 %v553
        %v1131 = vpop.f32.mrb[0].mxu0
        %v1132 = vadd.f32 %v630, %v1131
        %v1133 = vpop.f32.mrb[0].mxu0
        %v1134 = vadd.f32 %v634, %v1133
        %v1135 = vpop.f32.mrb[0].mxu0
        %v1136 = vadd.f32 %v630, %v1135
        %v1137 = vpop.f32.mrb[0].mxu0
        %v1138 = vadd.f32 %v634, %v1137
        %1139 = vmatprep.mubr.bf16.mxu0 %v558
        %1140 = vmatmul.mubr.bf16.gmra.mrb[0].mxu0 %v557
        %v1141 = vpop.f32.mrb[0].mxu0
        %v1142 = vadd.f32 %v630, %v1141
        %v1143 = vpop.f32.mrb[0].mxu0
        %v1144 = vadd.f32 %v634, %v1143
        %v1145 = vpop.f32.mrb[0].mxu0
        %v1146 = vadd.f32 %v630, %v1145
        %v1147 = vpop.f32.mrb[0].mxu0
        %v1148 = vadd.f32 %v634, %v1147
        %1149 = vdwg.mxu0
        %1150 = vmatprep.subr.bf16.mxu0 %v862
        %1151 = vmatpush1.bf16.msra.mxu0 %v861
        %1152 = vmatprep.subr.bf16.mxu0 %v864
        %1153 = vmatpush1.bf16.msra.mxu0 %v863
        %1154 = vmatprep.subr.bf16.mxu0 %v866
        %1155 = vmatpush1.bf16.msra.mxu0 %v865
        %1156 = vmatprep.subr.bf16.mxu0 %v868
        %1157 = vmatpush1.bf16.msra.mxu0 %v867
        %1158 = vmatprep.subr.bf16.mxu0 %v870
        %1159 = vmatpush1.bf16.msra.mxu0 %v869
        %1160 = vmatprep.subr.bf16.mxu0 %v872
        %1161 = vmatpush1.bf16.msra.mxu0 %v871
        %1162 = vmatprep.subr.bf16.mxu0 %v874
        %1163 = vmatpush1.bf16.msra.mxu0 %v873
        %1164 = vmatprep.subr.bf16.mxu0 %v876
        %1165 = vmatpush1.bf16.msra.mxu0 %v875
        %1166 = vmatprep.subr.bf16.mxu0 %v878
        %1167 = vmatpush1.bf16.msra.mxu0 %v877
        %1168 = vmatprep.subr.bf16.mxu0 %v880
        %1169 = vmatpush1.bf16.msra.mxu0 %v879
        %1170 = vmatprep.subr.bf16.mxu0 %v882
        %1171 = vmatpush1.bf16.msra.mxu0 %v881
        %1172 = vmatprep.subr.bf16.mxu0 %v884
        %1173 = vmatpush1.bf16.msra.mxu0 %v883
        %1174 = vmatprep.subr.bf16.mxu0 %v886
        %1175 = vmatpush1.bf16.msra.mxu0 %v885
        %1176 = vmatprep.subr.bf16.mxu0 %v888
        %1177 = vmatpush1.bf16.msra.mxu0 %v887
        %1178 = vmatprep.subr.bf16.mxu0 %v890
        %1179 = vmatpush1.bf16.msra.mxu0 %v889
        %1180 = vmatprep.subr.bf16.mxu0 %v892
        %1181 = vmatpush1.bf16.msra.mxu0 %v891
        %1182 = vmatprep.mubr.bf16.mxu0 %v500
        %1183 = vmatmul.mubr.bf16.gmra.mrb[0].mxu0 %v499
        %v1184 = vpop.f32.mrb[0].mxu0
        %v1185 = vadd.f32 %v992, %v1184
        %v1186 = vpop.f32.mrb[0].mxu0
        %v1187 = vadd.f32 %v994, %v1186
        %v1188 = vpop.f32.mrb[0].mxu0
        %v1189 = vadd.f32 %v996, %v1188
        %v1190 = vpop.f32.mrb[0].mxu0
        %v1191 = vadd.f32 %v998, %v1190
        %1192 = vmatprep.mubr.bf16.mxu0 %v504
        %1193 = vmatmul.mubr.bf16.gmra.mrb[0].mxu0 %v503
        %v1194 = vpop.f32.mrb[0].mxu0
        %v1195 = vadd.f32 %v1002, %v1194
        %v1196 = vpop.f32.mrb[0].mxu0
        %v1197 = vadd.f32 %v1004, %v1196
        %v1198 = vpop.f32.mrb[0].mxu0
        %v1199 = vadd.f32 %v1006, %v1198
        %v1200 = vpop.f32.mrb[0].mxu0
        %v1201 = vadd.f32 %v1008, %v1200
        %1202 = vmatprep.mubr.bf16.mxu0 %v508
        %1203 = vmatmul.mubr.bf16.gmra.mrb[0].mxu0 %v507
        %v1204 = vpop.f32.mrb[0].mxu0
        %v1205 = vadd.f32 %v1012, %v1204
        %v1206 = vpop.f32.mrb[0].mxu0
        %v1207 = vadd.f32 %v1014, %v1206
        %v1208 = vpop.f32.mrb[0].mxu0
        %v1209 = vadd.f32 %v1016, %v1208
        %v1210 = vpop.f32.mrb[0].mxu0
        %v1211 = vadd.f32 %v1018, %v1210
        %1212 = vmatprep.mubr.bf16.mxu0 %v512
        %1213 = vmatmul.mubr.bf16.gmra.mrb[0].mxu0 %v511
        %v1214 = vpop.f32.mrb[0].mxu0
        %v1215 = vadd.f32 %v1022, %v1214
        %v1216 = vpop.f32.mrb[0].mxu0
        %v1217 = vadd.f32 %v1024, %v1216
        %v1218 = vpop.f32.mrb[0].mxu0
        %v1219 = vadd.f32 %v1026, %v1218
        %v1220 = vpop.f32.mrb[0].mxu0
        %v1221 = vadd.f32 %v1028, %v1220
        %1222 = vmatprep.mubr.bf16.mxu0 %v516
        %1223 = vmatmul.mubr.bf16.gmra.mrb[0].mxu0 %v515
        %v1224 = vpop.f32.mrb[0].mxu0
        %v1225 = vadd.f32 %v1032, %v1224
        %v1226 = vpop.f32.mrb[0].mxu0
        %v1227 = vadd.f32 %v1034, %v1226
        %v1228 = vpop.f32.mrb[0].mxu0
        %v1229 = vadd.f32 %v1036, %v1228
        %v1230 = vpop.f32.mrb[0].mxu0
        %v1231 = vadd.f32 %v1038, %v1230
        %1232 = vmatprep.mubr.bf16.mxu0 %v520
        %1233 = vmatmul.mubr.bf16.gmra.mrb[0].mxu0 %v519
        %v1234 = vpop.f32.mrb[0].mxu0
        %v1235 = vadd.f32 %v1042, %v1234
        %v1236 = vpop.f32.mrb[0].mxu0
        %v1237 = vadd.f32 %v1044, %v1236
        %v1238 = vpop.f32.mrb[0].mxu0
        %v1239 = vadd.f32 %v1046, %v1238
        %v1240 = vpop.f32.mrb[0].mxu0
        %v1241 = vadd.f32 %v1048, %v1240
        %1242 = vmatprep.mubr.bf16.mxu0 %v524
        %1243 = vmatmul.mubr.bf16.gmra.mrb[0].mxu0 %v523
        %v1244 = vpop.f32.mrb[0].mxu0
        %v1245 = vadd.f32 %v1052, %v1244
        %v1246 = vpop.f32.mrb[0].mxu0
        %v1247 = vadd.f32 %v1054, %v1246
        %v1248 = vpop.f32.mrb[0].mxu0
        %v1249 = vadd.f32 %v1056, %v1248
        %v1250 = vpop.f32.mrb[0].mxu0
        %v1251 = vadd.f32 %v1058, %v1250
        %1252 = vmatprep.mubr.bf16.mxu0 %v528
        %1253 = vmatmul.mubr.bf16.gmra.mrb[0].mxu0 %v527
        %v1254 = vpop.f32.mrb[0].mxu0
        %v1255 = vadd.f32 %v1062, %v1254
        %v1256 = vpop.f32.mrb[0].mxu0
        %v1257 = vadd.f32 %v1064, %v1256
        %v1258 = vpop.f32.mrb[0].mxu0
        %v1259 = vadd.f32 %v1066, %v1258
        %v1260 = vpop.f32.mrb[0].mxu0
        %v1261 = vadd.f32 %v1068, %v1260
        %1262 = vmatprep.mubr.bf16.mxu0 %v532
        %1263 = vmatmul.mubr.bf16.gmra.mrb[0].mxu0 %v531
        %v1264 = vpop.f32.mrb[0].mxu0
        %v1265 = vadd.f32 %v1072, %v1264
        %v1266 = vpop.f32.mrb[0].mxu0
        %v1267 = vadd.f32 %v1074, %v1266
        %v1268 = vpop.f32.mrb[0].mxu0
        %v1269 = vadd.f32 %v1076, %v1268
        %v1270 = vpop.f32.mrb[0].mxu0
        %v1271 = vadd.f32 %v1078, %v1270
        %1272 = vmatprep.mubr.bf16.mxu0 %v536
        %1273 = vmatmul.mubr.bf16.gmra.mrb[0].mxu0 %v535
        %v1274 = vpop.f32.mrb[0].mxu0
        %v1275 = vadd.f32 %v1082, %v1274
        %v1276 = vpop.f32.mrb[0].mxu0
        %v1277 = vadd.f32 %v1084, %v1276
        %v1278 = vpop.f32.mrb[0].mxu0
        %v1279 = vadd.f32 %v1086, %v1278
        %v1280 = vpop.f32.mrb[0].mxu0
        %v1281 = vadd.f32 %v1088, %v1280
        %1282 = vmatprep.mubr.bf16.mxu0 %v540
        %1283 = vmatmul.mubr.bf16.gmra.mrb[0].mxu0 %v539
        %v1284 = vpop.f32.mrb[0].mxu0
        %v1285 = vadd.f32 %v1092, %v1284
        %v1286 = vpop.f32.mrb[0].mxu0
        %v1287 = vadd.f32 %v1094, %v1286
        %v1288 = vpop.f32.mrb[0].mxu0
        %v1289 = vadd.f32 %v1096, %v1288
        %v1290 = vpop.f32.mrb[0].mxu0
        %v1291 = vadd.f32 %v1098, %v1290
        %1292 = vmatprep.mubr.bf16.mxu0 %v544
        %1293 = vmatmul.mubr.bf16.gmra.mrb[0].mxu0 %v543
        %v1294 = vpop.f32.mrb[0].mxu0
        %v1295 = vadd.f32 %v1102, %v1294
        %v1296 = vpop.f32.mrb[0].mxu0
        %v1297 = vadd.f32 %v1104, %v1296
        %v1298 = vpop.f32.mrb[0].mxu0
        %v1299 = vadd.f32 %v1106, %v1298
        %v1300 = vpop.f32.mrb[0].mxu0
        %v1301 = vadd.f32 %v1108, %v1300
        %1302 = vmatprep.mubr.bf16.mxu0 %v548
        %1303 = vmatmul.mubr.bf16.gmra.mrb[0].mxu0 %v547
        %v1304 = vpop.f32.mrb[0].mxu0
        %v1305 = vadd.f32 %v1112, %v1304
        %v1306 = vpop.f32.mrb[0].mxu0
        %v1307 = vadd.f32 %v1114, %v1306
        %v1308 = vpop.f32.mrb[0].mxu0
        %v1309 = vadd.f32 %v1116, %v1308
        %v1310 = vpop.f32.mrb[0].mxu0
        %v1311 = vadd.f32 %v1118, %v1310
        %1312 = vmatprep.mubr.bf16.mxu0 %v552
        %1313 = vmatmul.mubr.bf16.gmra.mrb[0].mxu0 %v551
        %v1314 = vpop.f32.mrb[0].mxu0
        %v1315 = vadd.f32 %v1122, %v1314
        %v1316 = vpop.f32.mrb[0].mxu0
        %v1317 = vadd.f32 %v1124, %v1316
        %v1318 = vpop.f32.mrb[0].mxu0
        %v1319 = vadd.f32 %v1126, %v1318
        %v1320 = vpop.f32.mrb[0].mxu0
        %v1321 = vadd.f32 %v1128, %v1320
        %1322 = vmatprep.mubr.bf16.mxu0 %v556
        %1323 = vmatmul.mubr.bf16.gmra.mrb[0].mxu0 %v555
        %v1324 = vpop.f32.mrb[0].mxu0
        %v1325 = vadd.f32 %v1132, %v1324
        %v1326 = vpop.f32.mrb[0].mxu0
        %v1327 = vadd.f32 %v1134, %v1326
        %v1328 = vpop.f32.mrb[0].mxu0
        %v1329 = vadd.f32 %v1136, %v1328
        %v1330 = vpop.f32.mrb[0].mxu0
        %v1331 = vadd.f32 %v1138, %v1330
        %1332 = vmatprep.mubr.bf16.mxu0 %v560
        %1333 = vmatmul.mubr.bf16.gmra.mrb[0].mxu0 %v559
        %v1334 = vpop.f32.mrb[0].mxu0
        %v1335 = vadd.f32 %v1142, %v1334
        %v1336 = vpop.f32.mrb[0].mxu0
        %v1337 = vadd.f32 %v1144, %v1336
        %v1338 = vpop.f32.mrb[0].mxu0
        %v1339 = vadd.f32 %v1146, %v1338
        %v1340 = vpop.f32.mrb[0].mxu0
        %v1341 = vadd.f32 %v1148, %v1340
        %1342 = vdwg.mxu0
        %v1343 = vmax.f32 %v1185, 0.0
        %v1344 = vmax.f32 %v1187, 0.0
        %v1345 = vmax.f32 %v1189, 0.0
        %v1346 = vmax.f32 %v1191, 0.0
        %v1347 = vmax.f32 %v1195, 0.0
        %v1348 = vmax.f32 %v1197, 0.0
        %v1349 = vmax.f32 %v1199, 0.0
        %v1350 = vmax.f32 %v1201, 0.0
        %v1351 = vmax.f32 %v1205, 0.0
        %v1352 = vmax.f32 %v1207, 0.0
        %v1353 = vmax.f32 %v1209, 0.0
        %v1354 = vmax.f32 %v1211, 0.0
        %v1355 = vmax.f32 %v1215, 0.0
        %v1356 = vmax.f32 %v1217, 0.0
        %v1357 = vmax.f32 %v1219, 0.0
        %v1358 = vmax.f32 %v1221, 0.0
        %v1359 = vmax.f32 %v1225, 0.0
        %v1360 = vmax.f32 %v1227, 0.0
        %v1361 = vmax.f32 %v1229, 0.0
        %v1362 = vmax.f32 %v1231, 0.0
        %v1363 = vmax.f32 %v1235, 0.0
        %v1364 = vmax.f32 %v1237, 0.0
        %v1365 = vmax.f32 %v1239, 0.0
        %v1366 = vmax.f32 %v1241, 0.0
        %v1367 = vmax.f32 %v1245, 0.0
        %v1368 = vmax.f32 %v1247, 0.0
        %v1369 = vmax.f32 %v1249, 0.0
        %v1370 = vmax.f32 %v1251, 0.0
        %v1371 = vmax.f32 %v1255, 0.0
        %v1372 = vmax.f32 %v1257, 0.0
        %v1373 = vmax.f32 %v1259, 0.0
        %v1374 = vmax.f32 %v1261, 0.0
        %v1375 = vmax.f32 %v1265, 0.0
        %v1376 = vmax.f32 %v1267, 0.0
        %v1377 = vmax.f32 %v1269, 0.0
        %v1378 = vmax.f32 %v1271, 0.0
        %v1379 = vmax.f32 %v1275, 0.0
        %v1380 = vmax.f32 %v1277, 0.0
        %v1381 = vmax.f32 %v1279, 0.0
        %v1382 = vmax.f32 %v1281, 0.0
        %v1383 = vmax.f32 %v1285, 0.0
        %v1384 = vmax.f32 %v1287, 0.0
        %v1385 = vmax.f32 %v1289, 0.0
        %v1386 = vmax.f32 %v1291, 0.0
        %v1387 = vmax.f32 %v1295, 0.0
        %v1388 = vmax.f32 %v1297, 0.0
        %v1389 = vmax.f32 %v1299, 0.0
        %v1390 = vmax.f32 %v1301, 0.0
        %v1391 = vmax.f32 %v1305, 0.0
        %v1392 = vmax.f32 %v1307, 0.0
        %v1393 = vmax.f32 %v1309, 0.0
        %v1394 = vmax.f32 %v1311, 0.0
        %v1395 = vmax.f32 %v1315, 0.0
        %v1396 = vmax.f32 %v1317, 0.0
        %v1397 = vmax.f32 %v1319, 0.0
        %v1398 = vmax.f32 %v1321, 0.0
        %v1399 = vmax.f32 %v1325, 0.0
        %v1400 = vmax.f32 %v1327, 0.0
        %v1401 = vmax.f32 %v1329, 0.0
        %v1402 = vmax.f32 %v1331, 0.0
        %v1403 = vmax.f32 %v1335, 0.0
        %v1404 = vmax.f32 %v1337, 0.0
        %v1405 = vmax.f32 %v1339, 0.0
        %v1406 = vmax.f32 %v1341, 0.0
        %v1407 = vpack.c.bf16 %v1345, %v1343
        %v1408 = vpack.c.bf16 %v1346, %v1344
        %v1409 = vpack.c.bf16 %v1349, %v1347
        %v1410 = vpack.c.bf16 %v1350, %v1348
        %v1411 = vpack.c.bf16 %v1353, %v1351
        %v1412 = vpack.c.bf16 %v1354, %v1352
        %v1413 = vpack.c.bf16 %v1357, %v1355
        %v1414 = vpack.c.bf16 %v1358, %v1356
        %v1415 = vpack.c.bf16 %v1361, %v1359
        %v1416 = vpack.c.bf16 %v1362, %v1360
        %v1417 = vpack.c.bf16 %v1365, %v1363
        %v1418 = vpack.c.bf16 %v1366, %v1364
        %v1419 = vpack.c.bf16 %v1369, %v1367
        %v1420 = vpack.c.bf16 %v1370, %v1368
        %v1421 = vpack.c.bf16 %v1373, %v1371
        %v1422 = vpack.c.bf16 %v1374, %v1372
        %v1423 = vpack.c.bf16 %v1377, %v1375
        %v1424 = vpack.c.bf16 %v1378, %v1376
        %v1425 = vpack.c.bf16 %v1381, %v1379
        %v1426 = vpack.c.bf16 %v1382, %v1380
        %v1427 = vpack.c.bf16 %v1385, %v1383
        %v1428 = vpack.c.bf16 %v1386, %v1384
        %v1429 = vpack.c.bf16 %v1389, %v1387
        %v1430 = vpack.c.bf16 %v1390, %v1388
        %v1431 = vpack.c.bf16 %v1393, %v1391
        %v1432 = vpack.c.bf16 %v1394, %v1392
        %v1433 = vpack.c.bf16 %v1397, %v1395
        %v1434 = vpack.c.bf16 %v1398, %v1396
        %v1435 = vpack.c.bf16 %v1401, %v1399
        %v1436 = vpack.c.bf16 %v1402, %v1400
        %v1437 = vpack.c.bf16 %v1405, %v1403
        %v1438 = vpack.c.bf16 %v1406, %v1404
        %v1439 = vld [vmem:[#allocation6] sm:$0xf]
        %v1440 = vld [vmem:[#allocation6 + $0x4] sm:$0xf]
        %v1441 = vld [vmem:[#allocation6 + $0x8] sm:$0xf]
        %v1442 = vld [vmem:[#allocation6 + $0xc] sm:$0xf]
        %v1443 = vld [vmem:[#allocation6 + $0x10] sm:$0xf]
        %v1444 = vld [vmem:[#allocation6 + $0x14] sm:$0xf]
        %v1445 = vld [vmem:[#allocation6 + $0x18] sm:$0xf]
        %v1446 = vld [vmem:[#allocation6 + $0x1c] sm:$0xf]
        %v1447 = vld [vmem:[#allocation6 + $0x20] sm:$0xf]
        %v1448 = vld [vmem:[#allocation6 + $0x24] sm:$0xf]
        %v1449 = vld [vmem:[#allocation6 + $0x28] sm:$0xf]
        %v1450 = vld [vmem:[#allocation6 + $0x2c] sm:$0xf]
        %v1451 = vld [vmem:[#allocation6 + $0x30] sm:$0xf]
        %v1452 = vld [vmem:[#allocation6 + $0x34] sm:$0xf]
        %v1453 = vld [vmem:[#allocation6 + $0x38] sm:$0xf]
        %v1454 = vld [vmem:[#allocation6 + $0x3c] sm:$0xf]
        %v1455 = vld [vmem:[#allocation6 + $0x40] sm:$0xf]
        %v1456 = vld [vmem:[#allocation6 + $0x44] sm:$0xf]
        %v1457 = vld [vmem:[#allocation6 + $0x48] sm:$0xf]
        %v1458 = vld [vmem:[#allocation6 + $0x4c] sm:$0xf]
        %v1459 = vld [vmem:[#allocation6 + $0x50] sm:$0xf]
        %v1460 = vld [vmem:[#allocation6 + $0x54] sm:$0xf]
        %v1461 = vld [vmem:[#allocation6 + $0x58] sm:$0xf]
        %v1462 = vld [vmem:[#allocation6 + $0x5c] sm:$0xf]
        %v1463 = vld [vmem:[#allocation6 + $0x60] sm:$0xf]
        %v1464 = vld [vmem:[#allocation6 + $0x64] sm:$0xf]
        %v1465 = vld [vmem:[#allocation6 + $0x68] sm:$0xf]
        %v1466 = vld [vmem:[#allocation6 + $0x6c] sm:$0xf]
        %v1467 = vld [vmem:[#allocation6 + $0x70] sm:$0xf]
        %v1468 = vld [vmem:[#allocation6 + $0x74] sm:$0xf]
        %v1469 = vld [vmem:[#allocation6 + $0x78] sm:$0xf]
        %v1470 = vld [vmem:[#allocation6 + $0x7c] sm:$0xf]
        %v1471 = vld [vmem:[%s4] sm:$0x1]
        %v1473 = vlaneseq
        %v1474 = vshrl.u32 %v1473, 7
        %v1475 = vsub.s32 0, %v1474
        %v1476 = vrot.slane %v1471, %v1475
        %v1510 = vunpack.c.l.b16 %v1439
        %v1511 = vunpack.c.l.b16 %v1440
        %v1512 = vunpack.c.l.b16 %v1441
        %v1513 = vunpack.c.l.b16 %v1442
        %v1514 = vunpack.c.l.b16 %v1443
        %v1515 = vunpack.c.l.b16 %v1444
        %v1516 = vunpack.c.l.b16 %v1445
        %v1517 = vunpack.c.l.b16 %v1446
        %v1518 = vunpack.c.l.b16 %v1447
        %v1519 = vunpack.c.l.b16 %v1448
        %v1520 = vunpack.c.l.b16 %v1449
        %v1521 = vunpack.c.l.b16 %v1450
        %v1522 = vunpack.c.l.b16 %v1451
        %v1523 = vunpack.c.l.b16 %v1452
        %v1524 = vunpack.c.l.b16 %v1453
        %v1525 = vunpack.c.l.b16 %v1454
        %v1526 = vunpack.c.l.b16 %v1455
        %v1527 = vunpack.c.l.b16 %v1456
        %v1528 = vunpack.c.l.b16 %v1457
        %v1529 = vunpack.c.l.b16 %v1458
        %v1530 = vunpack.c.l.b16 %v1459
        %v1531 = vunpack.c.l.b16 %v1460
        %v1532 = vunpack.c.l.b16 %v1461
        %v1533 = vunpack.c.l.b16 %v1462
        %v1534 = vunpack.c.l.b16 %v1463
        %v1535 = vunpack.c.l.b16 %v1464
        %v1536 = vunpack.c.l.b16 %v1465
        %v1537 = vunpack.c.l.b16 %v1466
        %v1538 = vunpack.c.l.b16 %v1467
        %v1539 = vunpack.c.l.b16 %v1468
        %v1540 = vunpack.c.l.b16 %v1469
        %v1541 = vunpack.c.l.b16 %v1470
        %v1542 = vpack.c.b16 %v1511, %v1510
        %v1543 = vpack.c.b16 %v1513, %v1512
        %v1544 = vpack.c.b16 %v1515, %v1514
        %v1545 = vpack.c.b16 %v1517, %v1516
        %v1546 = vpack.c.b16 %v1519, %v1518
        %v1547 = vpack.c.b16 %v1521, %v1520
        %v1548 = vpack.c.b16 %v1523, %v1522
        %v1549 = vpack.c.b16 %v1525, %v1524
        %v1550 = vpack.c.b16 %v1527, %v1526
        %v1551 = vpack.c.b16 %v1529, %v1528
        %v1552 = vpack.c.b16 %v1531, %v1530
        %v1553 = vpack.c.b16 %v1533, %v1532
        %v1554 = vpack.c.b16 %v1535, %v1534
        %v1555 = vpack.c.b16 %v1537, %v1536
        %v1556 = vpack.c.b16 %v1539, %v1538
        %v1557 = vpack.c.b16 %v1541, %v1540
        %1574 = vmatprep.subr.bf16.mxu0 0
        %1575 = vmatpush1.bf16.msra.mxu0 %v1542
        %1576 = vmatprep.subr.bf16.mxu0 0
        %1577 = vmatpush1.bf16.msra.mxu0 %v1543
        %1578 = vmatprep.subr.bf16.mxu0 0
        %1579 = vmatpush1.bf16.msra.mxu0 %v1544
        %1580 = vmatprep.subr.bf16.mxu0 0
        %1581 = vmatpush1.bf16.msra.mxu0 %v1545
        %1582 = vmatprep.subr.bf16.mxu0 0
        %1583 = vmatpush1.bf16.msra.mxu0 %v1546
        %1584 = vmatprep.subr.bf16.mxu0 0
        %1585 = vmatpush1.bf16.msra.mxu0 %v1547
        %1586 = vmatprep.subr.bf16.mxu0 0
        %1587 = vmatpush1.bf16.msra.mxu0 %v1548
        %1588 = vmatprep.subr.bf16.mxu0 0
        %1589 = vmatpush1.bf16.msra.mxu0 %v1549
        %1590 = vmatprep.subr.bf16.mxu0 0
        %1591 = vmatpush1.bf16.msra.mxu0 %v1550
        %1592 = vmatprep.subr.bf16.mxu0 0
        %1593 = vmatpush1.bf16.msra.mxu0 %v1551
        %1594 = vmatprep.subr.bf16.mxu0 0
        %1595 = vmatpush1.bf16.msra.mxu0 %v1552
        %1596 = vmatprep.subr.bf16.mxu0 0
        %1597 = vmatpush1.bf16.msra.mxu0 %v1553
        %1598 = vmatprep.subr.bf16.mxu0 0
        %1599 = vmatpush1.bf16.msra.mxu0 %v1554
        %1600 = vmatprep.subr.bf16.mxu0 0
        %1601 = vmatpush1.bf16.msra.mxu0 %v1555
        %1602 = vmatprep.subr.bf16.mxu0 0
        %1603 = vmatpush1.bf16.msra.mxu0 %v1556
        %1604 = vmatprep.subr.bf16.mxu0 0
        %1605 = vmatpush1.bf16.msra.mxu0 %v1557
        %1606 = vmatprep.mubr.bf16.mxu0 %v1408
        %1607 = vmatmul.mubr.bf16.gmra.mrb[0].mxu0 %v1407
        %v1608 = vpop.f32.mrb[0].mxu0
        %v1609 = vadd.f32 %v1476, %v1608
        %v1610 = vpop.f32.mrb[0].mxu0
        %v1611 = vpop.f32.mrb[0].mxu0
        %v1612 = vadd.f32 %v1476, %v1611
        %v1613 = vpop.f32.mrb[0].mxu0
        %1614 = vmatprep.mubr.bf16.mxu0 %v1410
        %1615 = vmatmul.mubr.bf16.gmra.mrb[0].mxu0 %v1409
        %v1616 = vpop.f32.mrb[0].mxu0
        %v1617 = vadd.f32 %v1476, %v1616
        %v1618 = vpop.f32.mrb[0].mxu0
        %v1619 = vpop.f32.mrb[0].mxu0
        %v1620 = vadd.f32 %v1476, %v1619
        %v1621 = vpop.f32.mrb[0].mxu0
        %1622 = vmatprep.mubr.bf16.mxu0 %v1412
        %1623 = vmatmul.mubr.bf16.gmra.mrb[0].mxu0 %v1411
        %v1624 = vpop.f32.mrb[0].mxu0
        %v1625 = vadd.f32 %v1476, %v1624
        %v1626 = vpop.f32.mrb[0].mxu0
        %v1627 = vpop.f32.mrb[0].mxu0
        %v1628 = vadd.f32 %v1476, %v1627
        %v1629 = vpop.f32.mrb[0].mxu0
        %1630 = vmatprep.mubr.bf16.mxu0 %v1414
        %1631 = vmatmul.mubr.bf16.gmra.mrb[0].mxu0 %v1413
        %v1632 = vpop.f32.mrb[0].mxu0
        %v1633 = vadd.f32 %v1476, %v1632
        %v1634 = vpop.f32.mrb[0].mxu0
        %v1635 = vpop.f32.mrb[0].mxu0
        %v1636 = vadd.f32 %v1476, %v1635
        %v1637 = vpop.f32.mrb[0].mxu0
        %1638 = vmatprep.mubr.bf16.mxu0 %v1416
        %1639 = vmatmul.mubr.bf16.gmra.mrb[0].mxu0 %v1415
        %v1640 = vpop.f32.mrb[0].mxu0
        %v1641 = vadd.f32 %v1476, %v1640
        %v1642 = vpop.f32.mrb[0].mxu0
        %v1643 = vpop.f32.mrb[0].mxu0
        %v1644 = vadd.f32 %v1476, %v1643
        %v1645 = vpop.f32.mrb[0].mxu0
        %1646 = vmatprep.mubr.bf16.mxu0 %v1418
        %1647 = vmatmul.mubr.bf16.gmra.mrb[0].mxu0 %v1417
        %v1648 = vpop.f32.mrb[0].mxu0
        %v1649 = vadd.f32 %v1476, %v1648
        %v1650 = vpop.f32.mrb[0].mxu0
        %v1651 = vpop.f32.mrb[0].mxu0
        %v1652 = vadd.f32 %v1476, %v1651
        %v1653 = vpop.f32.mrb[0].mxu0
        %1654 = vmatprep.mubr.bf16.mxu0 %v1420
        %1655 = vmatmul.mubr.bf16.gmra.mrb[0].mxu0 %v1419
        %v1656 = vpop.f32.mrb[0].mxu0
        %v1657 = vadd.f32 %v1476, %v1656
        %v1658 = vpop.f32.mrb[0].mxu0
        %v1659 = vpop.f32.mrb[0].mxu0
        %v1660 = vadd.f32 %v1476, %v1659
        %v1661 = vpop.f32.mrb[0].mxu0
        %1662 = vmatprep.mubr.bf16.mxu0 %v1422
        %1663 = vmatmul.mubr.bf16.gmra.mrb[0].mxu0 %v1421
        %v1664 = vpop.f32.mrb[0].mxu0
        %v1665 = vadd.f32 %v1476, %v1664
        %v1666 = vpop.f32.mrb[0].mxu0
        %v1667 = vpop.f32.mrb[0].mxu0
        %v1668 = vadd.f32 %v1476, %v1667
        %v1669 = vpop.f32.mrb[0].mxu0
        %1670 = vmatprep.mubr.bf16.mxu0 %v1424
        %1671 = vmatmul.mubr.bf16.gmra.mrb[0].mxu0 %v1423
        %v1672 = vpop.f32.mrb[0].mxu0
        %v1673 = vadd.f32 %v1476, %v1672
        %v1674 = vpop.f32.mrb[0].mxu0
        %v1675 = vpop.f32.mrb[0].mxu0
        %v1676 = vadd.f32 %v1476, %v1675
        %v1677 = vpop.f32.mrb[0].mxu0
        %1678 = vmatprep.mubr.bf16.mxu0 %v1426
        %1679 = vmatmul.mubr.bf16.gmra.mrb[0].mxu0 %v1425
        %v1680 = vpop.f32.mrb[0].mxu0
        %v1681 = vadd.f32 %v1476, %v1680
        %v1682 = vpop.f32.mrb[0].mxu0
        %v1683 = vpop.f32.mrb[0].mxu0
        %v1684 = vadd.f32 %v1476, %v1683
        %v1685 = vpop.f32.mrb[0].mxu0
        %1686 = vmatprep.mubr.bf16.mxu0 %v1428
        %1687 = vmatmul.mubr.bf16.gmra.mrb[0].mxu0 %v1427
        %v1688 = vpop.f32.mrb[0].mxu0
        %v1689 = vadd.f32 %v1476, %v1688
        %v1690 = vpop.f32.mrb[0].mxu0
        %v1691 = vpop.f32.mrb[0].mxu0
        %v1692 = vadd.f32 %v1476, %v1691
        %v1693 = vpop.f32.mrb[0].mxu0
        %1694 = vmatprep.mubr.bf16.mxu0 %v1430
        %1695 = vmatmul.mubr.bf16.gmra.mrb[0].mxu0 %v1429
        %v1696 = vpop.f32.mrb[0].mxu0
        %v1697 = vadd.f32 %v1476, %v1696
        %v1698 = vpop.f32.mrb[0].mxu0
        %v1699 = vpop.f32.mrb[0].mxu0
        %v1700 = vadd.f32 %v1476, %v1699
        %v1701 = vpop.f32.mrb[0].mxu0
        %1702 = vmatprep.mubr.bf16.mxu0 %v1432
        %1703 = vmatmul.mubr.bf16.gmra.mrb[0].mxu0 %v1431
        %v1704 = vpop.f32.mrb[0].mxu0
        %v1705 = vadd.f32 %v1476, %v1704
        %v1706 = vpop.f32.mrb[0].mxu0
        %v1707 = vpop.f32.mrb[0].mxu0
        %v1708 = vadd.f32 %v1476, %v1707
        %v1709 = vpop.f32.mrb[0].mxu0
        %1710 = vmatprep.mubr.bf16.mxu0 %v1434
        %1711 = vmatmul.mubr.bf16.gmra.mrb[0].mxu0 %v1433
        %v1712 = vpop.f32.mrb[0].mxu0
        %v1713 = vadd.f32 %v1476, %v1712
        %v1714 = vpop.f32.mrb[0].mxu0
        %v1715 = vpop.f32.mrb[0].mxu0
        %v1716 = vadd.f32 %v1476, %v1715
        %v1717 = vpop.f32.mrb[0].mxu0
        %1718 = vmatprep.mubr.bf16.mxu0 %v1436
        %1719 = vmatmul.mubr.bf16.gmra.mrb[0].mxu0 %v1435
        %v1720 = vpop.f32.mrb[0].mxu0
        %v1721 = vadd.f32 %v1476, %v1720
        %v1722 = vpop.f32.mrb[0].mxu0
        %v1723 = vpop.f32.mrb[0].mxu0
        %v1724 = vadd.f32 %v1476, %v1723
        %v1725 = vpop.f32.mrb[0].mxu0
        %1726 = vmatprep.mubr.bf16.mxu0 %v1438
        %1727 = vmatmul.mubr.bf16.gmra.mrb[0].mxu0 %v1437
        %v1728 = vpop.f32.mrb[0].mxu0
        %v1729 = vadd.f32 %v1476, %v1728
        %v1730 = vpop.f32.mrb[0].mxu0
        %v1731 = vpop.f32.mrb[0].mxu0
        %v1732 = vadd.f32 %v1476, %v1731
        %v1733 = vpop.f32.mrb[0].mxu0
        %1734 = vdwg.mxu0
        %v1735 = vmax.f32 %v1609, 0.0
        %v1736 = vmax.f32 %v1612, 0.0
        %v1737 = vmax.f32 %v1617, 0.0
        %v1738 = vmax.f32 %v1620, 0.0
        %v1739 = vmax.f32 %v1625, 0.0
        %v1740 = vmax.f32 %v1628, 0.0
        %v1741 = vmax.f32 %v1633, 0.0
        %v1742 = vmax.f32 %v1636, 0.0
        %v1743 = vmax.f32 %v1641, 0.0
        %v1744 = vmax.f32 %v1644, 0.0
        %v1745 = vmax.f32 %v1649, 0.0
        %v1746 = vmax.f32 %v1652, 0.0
        %v1747 = vmax.f32 %v1657, 0.0
        %v1748 = vmax.f32 %v1660, 0.0
        %v1749 = vmax.f32 %v1665, 0.0
        %v1750 = vmax.f32 %v1668, 0.0
        %v1751 = vmax.f32 %v1673, 0.0
        %v1752 = vmax.f32 %v1676, 0.0
        %v1753 = vmax.f32 %v1681, 0.0
        %v1754 = vmax.f32 %v1684, 0.0
        %v1755 = vmax.f32 %v1689, 0.0
        %v1756 = vmax.f32 %v1692, 0.0
        %v1757 = vmax.f32 %v1697, 0.0
        %v1758 = vmax.f32 %v1700, 0.0
        %v1759 = vmax.f32 %v1705, 0.0
        %v1760 = vmax.f32 %v1708, 0.0
        %v1761 = vmax.f32 %v1713, 0.0
        %v1762 = vmax.f32 %v1716, 0.0
        %v1763 = vmax.f32 %v1721, 0.0
        %v1764 = vmax.f32 %v1724, 0.0
        %v1765 = vmax.f32 %v1729, 0.0
        %v1766 = vmax.f32 %v1732, 0.0
        %v1767 = vpack.c.bf16 %v1736, %v1735
        %v1768 = vpack.c.bf16 %v1738, %v1737
        %v1769 = vpack.c.bf16 %v1740, %v1739
        %v1770 = vpack.c.bf16 %v1742, %v1741
        %v1771 = vpack.c.bf16 %v1744, %v1743
        %v1772 = vpack.c.bf16 %v1746, %v1745
        %v1773 = vpack.c.bf16 %v1748, %v1747
        %v1774 = vpack.c.bf16 %v1750, %v1749
        %v1775 = vpack.c.bf16 %v1752, %v1751
        %v1776 = vpack.c.bf16 %v1754, %v1753
        %v1777 = vpack.c.bf16 %v1756, %v1755
        %v1778 = vpack.c.bf16 %v1758, %v1757
        %v1779 = vpack.c.bf16 %v1760, %v1759
        %v1780 = vpack.c.bf16 %v1762, %v1761
        %v1781 = vpack.c.bf16 %v1764, %v1763
        %v1782 = vpack.c.bf16 %v1766, %v1765
        %v1783 = vld [vmem:[#allocation7] sm:$0xf]
        %v1784 = vld [vmem:[#allocation7 + $0x4] sm:$0xf]
        %v1785 = vld [vmem:[#allocation7 + $0x8] sm:$0xf]
        %v1786 = vld [vmem:[#allocation7 + $0xc] sm:$0xf]
        %v1787 = vld [vmem:[#allocation7 + $0x10] sm:$0xf]
        %v1788 = vld [vmem:[#allocation7 + $0x14] sm:$0xf]
        %v1789 = vld [vmem:[#allocation7 + $0x18] sm:$0xf]
        %v1790 = vld [vmem:[#allocation7 + $0x1c] sm:$0xf]
        %v1791 = vld [vmem:[#allocation7 + $0x20] sm:$0xf]
        %v1792 = vld [vmem:[#allocation7 + $0x24] sm:$0xf]
        %v1793 = vld [vmem:[#allocation7 + $0x28] sm:$0xf]
        %v1794 = vld [vmem:[#allocation7 + $0x2c] sm:$0xf]
        %v1795 = vld [vmem:[#allocation7 + $0x30] sm:$0xf]
        %v1796 = vld [vmem:[#allocation7 + $0x34] sm:$0xf]
        %v1797 = vld [vmem:[#allocation7 + $0x38] sm:$0xf]
        %v1798 = vld [vmem:[#allocation7 + $0x3c] sm:$0xf]
        %v1799 = vld [vmem:[#allocation9] sm:$0x1]
        %v1801 = vlaneseq
        %v1802 = vshrl.u32 %v1801, 7
        %v1803 = vsub.s32 0, %v1802
        %v1804 = vrot.slane %v1799, %v1803
        %v1822 = vunpack.c.l.b16 %v1783
        %v1823 = vunpack.c.l.b16 %v1784
        %v1824 = vunpack.c.l.b16 %v1785
        %v1825 = vunpack.c.l.b16 %v1786
        %v1826 = vunpack.c.l.b16 %v1787
        %v1827 = vunpack.c.l.b16 %v1788
        %v1828 = vunpack.c.l.b16 %v1789
        %v1829 = vunpack.c.l.b16 %v1790
        %v1830 = vunpack.c.l.b16 %v1791
        %v1831 = vunpack.c.l.b16 %v1792
        %v1832 = vunpack.c.l.b16 %v1793
        %v1833 = vunpack.c.l.b16 %v1794
        %v1834 = vunpack.c.l.b16 %v1795
        %v1835 = vunpack.c.l.b16 %v1796
        %v1836 = vunpack.c.l.b16 %v1797
        %v1837 = vunpack.c.l.b16 %v1798
        %v1838 = vpack.c.b16 %v1823, %v1822
        %v1839 = vpack.c.b16 %v1825, %v1824
        %v1840 = vpack.c.b16 %v1827, %v1826
        %v1841 = vpack.c.b16 %v1829, %v1828
        %v1842 = vpack.c.b16 %v1831, %v1830
        %v1843 = vpack.c.b16 %v1833, %v1832
        %v1844 = vpack.c.b16 %v1835, %v1834
        %v1845 = vpack.c.b16 %v1837, %v1836
        %1854 = vmatprep.subr.bf16.mxu0 0
        %1855 = vmatpush1.bf16.msra.mxu0 %v1838
        %1856 = vmatprep.subr.bf16.mxu0 0
        %1857 = vmatpush1.bf16.msra.mxu0 %v1839
        %1858 = vmatprep.subr.bf16.mxu0 0
        %1859 = vmatpush1.bf16.msra.mxu0 %v1840
        %1860 = vmatprep.subr.bf16.mxu0 0
        %1861 = vmatpush1.bf16.msra.mxu0 %v1841
        %1862 = vmatprep.subr.bf16.mxu0 0
        %1863 = vmatpush1.bf16.msra.mxu0 %v1842
        %1864 = vmatprep.subr.bf16.mxu0 0
        %1865 = vmatpush1.bf16.msra.mxu0 %v1843
        %1866 = vmatprep.subr.bf16.mxu0 0
        %1867 = vmatpush1.bf16.msra.mxu0 %v1844
        %1868 = vmatprep.subr.bf16.mxu0 0
        %1869 = vmatpush1.bf16.msra.mxu0 %v1845
        %1870 = vmatprep.subr.bf16.mxu0 0
        %1871 = vmatpush1.bf16.msra.mxu0 0
        %1872 = vmatprep.subr.bf16.mxu0 0
        %1873 = vmatpush1.bf16.msra.mxu0 0
        %1874 = vmatprep.subr.bf16.mxu0 0
        %1875 = vmatpush1.bf16.msra.mxu0 0
        %1876 = vmatprep.subr.bf16.mxu0 0
        %1877 = vmatpush1.bf16.msra.mxu0 0
        %1878 = vmatprep.subr.bf16.mxu0 0
        %1879 = vmatpush1.bf16.msra.mxu0 0
        %1880 = vmatprep.subr.bf16.mxu0 0
        %1881 = vmatpush1.bf16.msra.mxu0 0
        %1882 = vmatprep.subr.bf16.mxu0 0
        %1883 = vmatpush1.bf16.msra.mxu0 0
        %1884 = vmatprep.subr.bf16.mxu0 0
        %1885 = vmatpush1.bf16.msra.mxu0 0
        %1886 = vmatprep.mubr.bf16.mxu0 0
        %1887 = vmatmul.mubr.bf16.gmra.mrb[0].mxu0 %v1767
        %v1888 = vpop.f32.mrb[0].mxu0
        %v1889 = vadd.f32 %v1804, %v1888
        %v1890 = vpop.f32.mrb[0].mxu0
        %v1891 = vpop.f32.mrb[0].mxu0
        %v1892 = vadd.f32 %v1804, %v1891
        %v1893 = vpop.f32.mrb[0].mxu0
        %1894 = vmatprep.mubr.bf16.mxu0 0
        %1895 = vmatmul.mubr.bf16.gmra.mrb[0].mxu0 %v1768
        %v1896 = vpop.f32.mrb[0].mxu0
        %v1897 = vadd.f32 %v1804, %v1896
        %v1898 = vpop.f32.mrb[0].mxu0
        %v1899 = vpop.f32.mrb[0].mxu0
        %v1900 = vadd.f32 %v1804, %v1899
        %v1901 = vpop.f32.mrb[0].mxu0
        %1902 = vmatprep.mubr.bf16.mxu0 0
        %1903 = vmatmul.mubr.bf16.gmra.mrb[0].mxu0 %v1769
        %v1904 = vpop.f32.mrb[0].mxu0
        %v1905 = vadd.f32 %v1804, %v1904
        %v1906 = vpop.f32.mrb[0].mxu0
        %v1907 = vpop.f32.mrb[0].mxu0
        %v1908 = vadd.f32 %v1804, %v1907
        %v1909 = vpop.f32.mrb[0].mxu0
        %1910 = vmatprep.mubr.bf16.mxu0 0
        %1911 = vmatmul.mubr.bf16.gmra.mrb[0].mxu0 %v1770
        %v1912 = vpop.f32.mrb[0].mxu0
        %v1913 = vadd.f32 %v1804, %v1912
        %v1914 = vpop.f32.mrb[0].mxu0
        %v1915 = vpop.f32.mrb[0].mxu0
        %v1916 = vadd.f32 %v1804, %v1915
        %v1917 = vpop.f32.mrb[0].mxu0
        %1918 = vmatprep.mubr.bf16.mxu0 0
        %1919 = vmatmul.mubr.bf16.gmra.mrb[0].mxu0 %v1771
        %v1920 = vpop.f32.mrb[0].mxu0
        %v1921 = vadd.f32 %v1804, %v1920
        %v1922 = vpop.f32.mrb[0].mxu0
        %v1923 = vpop.f32.mrb[0].mxu0
        %v1924 = vadd.f32 %v1804, %v1923
        %v1925 = vpop.f32.mrb[0].mxu0
        %1926 = vmatprep.mubr.bf16.mxu0 0
        %1927 = vmatmul.mubr.bf16.gmra.mrb[0].mxu0 %v1772
        %v1928 = vpop.f32.mrb[0].mxu0
        %v1929 = vadd.f32 %v1804, %v1928
        %v1930 = vpop.f32.mrb[0].mxu0
        %v1931 = vpop.f32.mrb[0].mxu0
        %v1932 = vadd.f32 %v1804, %v1931
        %v1933 = vpop.f32.mrb[0].mxu0
        %1934 = vmatprep.mubr.bf16.mxu0 0
        %1935 = vmatmul.mubr.bf16.gmra.mrb[0].mxu0 %v1773
        %v1936 = vpop.f32.mrb[0].mxu0
        %v1937 = vadd.f32 %v1804, %v1936
        %v1938 = vpop.f32.mrb[0].mxu0
        %v1939 = vpop.f32.mrb[0].mxu0
        %v1940 = vadd.f32 %v1804, %v1939
        %v1941 = vpop.f32.mrb[0].mxu0
        %1942 = vmatprep.mubr.bf16.mxu0 0
        %1943 = vmatmul.mubr.bf16.gmra.mrb[0].mxu0 %v1774
        %v1944 = vpop.f32.mrb[0].mxu0
        %v1945 = vadd.f32 %v1804, %v1944
        %v1946 = vpop.f32.mrb[0].mxu0
        %v1947 = vpop.f32.mrb[0].mxu0
        %v1948 = vadd.f32 %v1804, %v1947
        %v1949 = vpop.f32.mrb[0].mxu0
        %1950 = vmatprep.mubr.bf16.mxu0 0
        %1951 = vmatmul.mubr.bf16.gmra.mrb[0].mxu0 %v1775
        %v1952 = vpop.f32.mrb[0].mxu0
        %v1953 = vadd.f32 %v1804, %v1952
        %v1954 = vpop.f32.mrb[0].mxu0
        %v1955 = vpop.f32.mrb[0].mxu0
        %v1956 = vadd.f32 %v1804, %v1955
        %v1957 = vpop.f32.mrb[0].mxu0
        %1958 = vmatprep.mubr.bf16.mxu0 0
        %1959 = vmatmul.mubr.bf16.gmra.mrb[0].mxu0 %v1776
        %v1960 = vpop.f32.mrb[0].mxu0
        %v1961 = vadd.f32 %v1804, %v1960
        %v1962 = vpop.f32.mrb[0].mxu0
        %v1963 = vpop.f32.mrb[0].mxu0
        %v1964 = vadd.f32 %v1804, %v1963
        %v1965 = vpop.f32.mrb[0].mxu0
        %1966 = vmatprep.mubr.bf16.mxu0 0
        %1967 = vmatmul.mubr.bf16.gmra.mrb[0].mxu0 %v1777
        %v1968 = vpop.f32.mrb[0].mxu0
        %v1969 = vadd.f32 %v1804, %v1968
        %v1970 = vpop.f32.mrb[0].mxu0
        %v1971 = vpop.f32.mrb[0].mxu0
        %v1972 = vadd.f32 %v1804, %v1971
        %v1973 = vpop.f32.mrb[0].mxu0
        %1974 = vmatprep.mubr.bf16.mxu0 0
        %1975 = vmatmul.mubr.bf16.gmra.mrb[0].mxu0 %v1778
        %v1976 = vpop.f32.mrb[0].mxu0
        %v1977 = vadd.f32 %v1804, %v1976
        %v1978 = vpop.f32.mrb[0].mxu0
        %v1979 = vpop.f32.mrb[0].mxu0
        %v1980 = vadd.f32 %v1804, %v1979
        %v1981 = vpop.f32.mrb[0].mxu0
        %1982 = vmatprep.mubr.bf16.mxu0 0
        %1983 = vmatmul.mubr.bf16.gmra.mrb[0].mxu0 %v1779
        %v1984 = vpop.f32.mrb[0].mxu0
        %v1985 = vadd.f32 %v1804, %v1984
        %v1986 = vpop.f32.mrb[0].mxu0
        %v1987 = vpop.f32.mrb[0].mxu0
        %v1988 = vadd.f32 %v1804, %v1987
        %v1989 = vpop.f32.mrb[0].mxu0
        %1990 = vmatprep.mubr.bf16.mxu0 0
        %1991 = vmatmul.mubr.bf16.gmra.mrb[0].mxu0 %v1780
        %v1992 = vpop.f32.mrb[0].mxu0
        %v1993 = vadd.f32 %v1804, %v1992
        %v1994 = vpop.f32.mrb[0].mxu0
        %v1995 = vpop.f32.mrb[0].mxu0
        %v1996 = vadd.f32 %v1804, %v1995
        %v1997 = vpop.f32.mrb[0].mxu0
        %1998 = vmatprep.mubr.bf16.mxu0 0
        %1999 = vmatmul.mubr.bf16.gmra.mrb[0].mxu0 %v1781
        %v2000 = vpop.f32.mrb[0].mxu0
        %v2001 = vadd.f32 %v1804, %v2000
        %v2002 = vpop.f32.mrb[0].mxu0
        %v2003 = vpop.f32.mrb[0].mxu0
        %v2004 = vadd.f32 %v1804, %v2003
        %v2005 = vpop.f32.mrb[0].mxu0
        %2006 = vmatprep.mubr.bf16.mxu0 0
        %2007 = vmatmul.mubr.bf16.gmra.mrb[0].mxu0 %v1782
        %v2008 = vpop.f32.mrb[0].mxu0
        %v2009 = vadd.f32 %v1804, %v2008
        %v2010 = vpop.f32.mrb[0].mxu0
        %v2011 = vpop.f32.mrb[0].mxu0
        %v2012 = vadd.f32 %v1804, %v2011
        %v2013 = vpop.f32.mrb[0].mxu0
        %2014 = vdwg.mxu0
        %v2015 = vsub.f32 0.0, %v1889
        %v2016 = vsub.f32 0.0, %v1892
        %v2017 = vsub.f32 0.0, %v1897
        %v2018 = vsub.f32 0.0, %v1900
        %v2019 = vsub.f32 0.0, %v1905
        %v2020 = vsub.f32 0.0, %v1908
        %v2021 = vsub.f32 0.0, %v1913
        %v2022 = vsub.f32 0.0, %v1916
        %v2023 = vsub.f32 0.0, %v1921
        %v2024 = vsub.f32 0.0, %v1924
        %v2025 = vsub.f32 0.0, %v1929
        %v2026 = vsub.f32 0.0, %v1932
        %v2027 = vsub.f32 0.0, %v1937
        %v2028 = vsub.f32 0.0, %v1940
        %v2029 = vsub.f32 0.0, %v1945
        %v2030 = vsub.f32 0.0, %v1948
        %v2031 = vsub.f32 0.0, %v1953
        %v2032 = vsub.f32 0.0, %v1956
        %v2033 = vsub.f32 0.0, %v1961
        %v2034 = vsub.f32 0.0, %v1964
        %v2035 = vsub.f32 0.0, %v1969
        %v2036 = vsub.f32 0.0, %v1972
        %v2037 = vsub.f32 0.0, %v1977
        %v2038 = vsub.f32 0.0, %v1980
        %v2039 = vsub.f32 0.0, %v1985
        %v2040 = vsub.f32 0.0, %v1988
        %v2041 = vsub.f32 0.0, %v1993
        %v2042 = vsub.f32 0.0, %v1996
        %v2043 = vsub.f32 0.0, %v2001
        %v2044 = vsub.f32 0.0, %v2004
        %v2045 = vsub.f32 0.0, %v2009
        %v2046 = vsub.f32 0.0, %v2012
        %v2047 = vmul.f32 %v2015, 1.442695
        %v2048 = vpow.pop %v2047
        %v2049 = vmul.f32 %v2016, 1.442695
        %v2050 = vpow.pop %v2049
        %v2051 = vmul.f32 %v2017, 1.442695
        %v2052 = vpow.pop %v2051
        %v2053 = vmul.f32 %v2018, 1.442695
        %v2054 = vpow.pop %v2053
        %v2055 = vmul.f32 %v2019, 1.442695
        %v2056 = vpow.pop %v2055
        %v2057 = vmul.f32 %v2020, 1.442695
        %v2058 = vpow.pop %v2057
        %v2059 = vmul.f32 %v2021, 1.442695
        %v2060 = vpow.pop %v2059
        %v2061 = vmul.f32 %v2022, 1.442695
        %v2062 = vpow.pop %v2061
        %v2063 = vmul.f32 %v2023, 1.442695
        %v2064 = vpow.pop %v2063
        %v2065 = vmul.f32 %v2024, 1.442695
        %v2066 = vpow.pop %v2065
        %v2067 = vmul.f32 %v2025, 1.442695
        %v2068 = vpow.pop %v2067
        %v2069 = vmul.f32 %v2026, 1.442695
        %v2070 = vpow.pop %v2069
        %v2071 = vmul.f32 %v2027, 1.442695
        %v2072 = vpow.pop %v2071
        %v2073 = vmul.f32 %v2028, 1.442695
        %v2074 = vpow.pop %v2073
        %v2075 = vmul.f32 %v2029, 1.442695
        %v2076 = vpow.pop %v2075
        %v2077 = vmul.f32 %v2030, 1.442695
        %v2078 = vpow.pop %v2077
        %v2079 = vmul.f32 %v2031, 1.442695
        %v2080 = vpow.pop %v2079
        %v2081 = vmul.f32 %v2032, 1.442695
        %v2082 = vpow.pop %v2081
        %v2083 = vmul.f32 %v2033, 1.442695
        %v2084 = vpow.pop %v2083
        %v2085 = vmul.f32 %v2034, 1.442695
        %v2086 = vpow.pop %v2085
        %v2087 = vmul.f32 %v2035, 1.442695
        %v2088 = vpow.pop %v2087
        %v2089 = vmul.f32 %v2036, 1.442695
        %v2090 = vpow.pop %v2089
        %v2091 = vmul.f32 %v2037, 1.442695
        %v2092 = vpow.pop %v2091
        %v2093 = vmul.f32 %v2038, 1.442695
        %v2094 = vpow.pop %v2093
        %v2095 = vmul.f32 %v2039, 1.442695
        %v2096 = vpow.pop %v2095
        %v2097 = vmul.f32 %v2040, 1.442695
        %v2098 = vpow.pop %v2097
        %v2099 = vmul.f32 %v2041, 1.442695
        %v2100 = vpow.pop %v2099
        %v2101 = vmul.f32 %v2042, 1.442695
        %v2102 = vpow.pop %v2101
        %v2103 = vmul.f32 %v2043, 1.442695
        %v2104 = vpow.pop %v2103
        %v2105 = vmul.f32 %v2044, 1.442695
        %v2106 = vpow.pop %v2105
        %v2107 = vmul.f32 %v2045, 1.442695
        %v2108 = vpow.pop %v2107
        %v2109 = vmul.f32 %v2046, 1.442695
        %v2110 = vpow.pop %v2109
        %v2111 = vadd.f32 %v2048, 1.0
        %v2112 = vadd.f32 %v2050, 1.0
        %v2113 = vadd.f32 %v2052, 1.0
        %v2114 = vadd.f32 %v2054, 1.0
        %v2115 = vadd.f32 %v2056, 1.0
        %v2116 = vadd.f32 %v2058, 1.0
        %v2117 = vadd.f32 %v2060, 1.0
        %v2118 = vadd.f32 %v2062, 1.0
        %v2119 = vadd.f32 %v2064, 1.0
        %v2120 = vadd.f32 %v2066, 1.0
        %v2121 = vadd.f32 %v2068, 1.0
        %v2122 = vadd.f32 %v2070, 1.0
        %v2123 = vadd.f32 %v2072, 1.0
        %v2124 = vadd.f32 %v2074, 1.0
        %v2125 = vadd.f32 %v2076, 1.0
        %v2126 = vadd.f32 %v2078, 1.0
        %v2127 = vadd.f32 %v2080, 1.0
        %v2128 = vadd.f32 %v2082, 1.0
        %v2129 = vadd.f32 %v2084, 1.0
        %v2130 = vadd.f32 %v2086, 1.0
        %v2131 = vadd.f32 %v2088, 1.0
        %v2132 = vadd.f32 %v2090, 1.0
        %v2133 = vadd.f32 %v2092, 1.0
        %v2134 = vadd.f32 %v2094, 1.0
        %v2135 = vadd.f32 %v2096, 1.0
        %v2136 = vadd.f32 %v2098, 1.0
        %v2137 = vadd.f32 %v2100, 1.0
        %v2138 = vadd.f32 %v2102, 1.0
        %v2139 = vadd.f32 %v2104, 1.0
        %v2140 = vadd.f32 %v2106, 1.0
        %v2141 = vadd.f32 %v2108, 1.0
        %v2142 = vadd.f32 %v2110, 1.0
        %v2143 = vrcp.pop %v2111
        %v2144 = vrcp.pop %v2112
        %v2145 = vrcp.pop %v2113
        %v2146 = vrcp.pop %v2114
        %v2147 = vrcp.pop %v2115
        %v2148 = vrcp.pop %v2116
        %v2149 = vrcp.pop %v2117
        %v2150 = vrcp.pop %v2118
        %v2151 = vrcp.pop %v2119
        %v2152 = vrcp.pop %v2120
        %v2153 = vrcp.pop %v2121
        %v2154 = vrcp.pop %v2122
        %v2155 = vrcp.pop %v2123
        %v2156 = vrcp.pop %v2124
        %v2157 = vrcp.pop %v2125
        %v2158 = vrcp.pop %v2126
        %v2159 = vrcp.pop %v2127
        %v2160 = vrcp.pop %v2128
        %v2161 = vrcp.pop %v2129
        %v2162 = vrcp.pop %v2130
        %v2163 = vrcp.pop %v2131
        %v2164 = vrcp.pop %v2132
        %v2165 = vrcp.pop %v2133
        %v2166 = vrcp.pop %v2134
        %v2167 = vrcp.pop %v2135
        %v2168 = vrcp.pop %v2136
        %v2169 = vrcp.pop %v2137
        %v2170 = vrcp.pop %v2138
        %v2171 = vrcp.pop %v2139
        %v2172 = vrcp.pop %v2140
        %v2173 = vrcp.pop %v2141
        %v2174 = vrcp.pop %v2142
        %v2175 = vpack.c.bf16 %v2144, %v2143
        %v2176 = vpack.c.bf16 %v2146, %v2145
        %v2177 = vpack.c.bf16 %v2148, %v2147
        %v2178 = vpack.c.bf16 %v2150, %v2149
        %v2179 = vpack.c.bf16 %v2152, %v2151
        %v2180 = vpack.c.bf16 %v2154, %v2153
        %v2181 = vpack.c.bf16 %v2156, %v2155
        %v2182 = vpack.c.bf16 %v2158, %v2157
        %v2183 = vpack.c.bf16 %v2160, %v2159
        %v2184 = vpack.c.bf16 %v2162, %v2161
        %v2185 = vpack.c.bf16 %v2164, %v2163
        %v2186 = vpack.c.bf16 %v2166, %v2165
        %v2187 = vpack.c.bf16 %v2168, %v2167
        %v2188 = vpack.c.bf16 %v2170, %v2169
        %v2189 = vpack.c.bf16 %v2172, %v2171
        %v2190 = vpack.c.bf16 %v2174, %v2173
        %v2207 = vunpack.c.l.b16 %v2175
        %v2208 = vunpack.c.h.b16 %v2175
        %v2209 = vunpack.c.l.b16 %v2176
        %v2210 = vunpack.c.h.b16 %v2176
        %v2211 = vunpack.c.l.b16 %v2177
        %v2212 = vunpack.c.h.b16 %v2177
        %v2213 = vunpack.c.l.b16 %v2178
        %v2214 = vunpack.c.h.b16 %v2178
        %v2215 = vunpack.c.l.b16 %v2179
        %v2216 = vunpack.c.h.b16 %v2179
        %v2217 = vunpack.c.l.b16 %v2180
        %v2218 = vunpack.c.h.b16 %v2180
        %v2219 = vunpack.c.l.b16 %v2181
        %v2220 = vunpack.c.h.b16 %v2181
        %v2221 = vunpack.c.l.b16 %v2182
        %v2222 = vunpack.c.h.b16 %v2182
        %v2223 = vunpack.c.l.b16 %v2183
        %v2224 = vunpack.c.h.b16 %v2183
        %v2225 = vunpack.c.l.b16 %v2184
        %v2226 = vunpack.c.h.b16 %v2184
        %v2227 = vunpack.c.l.b16 %v2185
        %v2228 = vunpack.c.h.b16 %v2185
        %v2229 = vunpack.c.l.b16 %v2186
        %v2230 = vunpack.c.h.b16 %v2186
        %v2231 = vunpack.c.l.b16 %v2187
        %v2232 = vunpack.c.h.b16 %v2187
        %v2233 = vunpack.c.l.b16 %v2188
        %v2234 = vunpack.c.h.b16 %v2188
        %v2235 = vunpack.c.l.b16 %v2189
        %v2236 = vunpack.c.h.b16 %v2189
        %v2237 = vunpack.c.l.b16 %v2190
        %v2238 = vunpack.c.h.b16 %v2190
        %v2239 = vpack.c.b16 %v2207, %v2207
        %v2240 = vpack.c.b16 %v2208, %v2208
        %v2241 = vpack.c.b16 %v2209, %v2209
        %v2242 = vpack.c.b16 %v2210, %v2210
        %v2243 = vpack.c.b16 %v2211, %v2211
        %v2244 = vpack.c.b16 %v2212, %v2212
        %v2245 = vpack.c.b16 %v2213, %v2213
        %v2246 = vpack.c.b16 %v2214, %v2214
        %v2247 = vpack.c.b16 %v2215, %v2215
        %v2248 = vpack.c.b16 %v2216, %v2216
        %v2249 = vpack.c.b16 %v2217, %v2217
        %v2250 = vpack.c.b16 %v2218, %v2218
        %v2251 = vpack.c.b16 %v2219, %v2219
        %v2252 = vpack.c.b16 %v2220, %v2220
        %v2253 = vpack.c.b16 %v2221, %v2221
        %v2254 = vpack.c.b16 %v2222, %v2222
        %v2255 = vpack.c.b16 %v2223, %v2223
        %v2256 = vpack.c.b16 %v2224, %v2224
        %v2257 = vpack.c.b16 %v2225, %v2225
        %v2258 = vpack.c.b16 %v2226, %v2226
        %v2259 = vpack.c.b16 %v2227, %v2227
        %v2260 = vpack.c.b16 %v2228, %v2228
        %v2261 = vpack.c.b16 %v2229, %v2229
        %v2262 = vpack.c.b16 %v2230, %v2230
        %v2263 = vpack.c.b16 %v2231, %v2231
        %v2264 = vpack.c.b16 %v2232, %v2232
        %v2265 = vpack.c.b16 %v2233, %v2233
        %v2266 = vpack.c.b16 %v2234, %v2234
        %v2267 = vpack.c.b16 %v2235, %v2235
        %v2268 = vpack.c.b16 %v2236, %v2236
        %v2269 = vpack.c.b16 %v2237, %v2237
        %v2270 = vpack.c.b16 %v2238, %v2238
        %2303 = vst [vmem:[%s356] sm:$0xf] %v2239
        %2304 = vst [vmem:[%s356 + $0x4] sm:$0xf] %v2240
        %2305 = vst [vmem:[%s356 + $0x8] sm:$0xf] %v2241
        %2306 = vst [vmem:[%s356 + $0xc] sm:$0xf] %v2242
        %2307 = vst [vmem:[%s356 + $0x10] sm:$0xf] %v2243
        %2308 = vst [vmem:[%s356 + $0x14] sm:$0xf] %v2244
        %2309 = vst [vmem:[%s356 + $0x18] sm:$0xf] %v2245
        %2310 = vst [vmem:[%s356 + $0x1c] sm:$0xf] %v2246
        %2311 = vst [vmem:[%s356 + $0x20] sm:$0xf] %v2247
        %2312 = vst [vmem:[%s356 + $0x24] sm:$0xf] %v2248
        %2313 = vst [vmem:[%s356 + $0x28] sm:$0xf] %v2249
        %2314 = vst [vmem:[%s356 + $0x2c] sm:$0xf] %v2250
        %2315 = vst [vmem:[%s356 + $0x30] sm:$0xf] %v2251
        %2316 = vst [vmem:[%s356 + $0x34] sm:$0xf] %v2252
        %2317 = vst [vmem:[%s356 + $0x38] sm:$0xf] %v2253
        %2318 = vst [vmem:[%s356 + $0x3c] sm:$0xf] %v2254
        %2319 = vst [vmem:[%s356 + $0x40] sm:$0xf] %v2255
        %2320 = vst [vmem:[%s356 + $0x44] sm:$0xf] %v2256
        %2321 = vst [vmem:[%s356 + $0x48] sm:$0xf] %v2257
        %2322 = vst [vmem:[%s356 + $0x4c] sm:$0xf] %v2258
        %2323 = vst [vmem:[%s356 + $0x50] sm:$0xf] %v2259
        %2324 = vst [vmem:[%s356 + $0x54] sm:$0xf] %v2260
        %2325 = vst [vmem:[%s356 + $0x58] sm:$0xf] %v2261
        %2326 = vst [vmem:[%s356 + $0x5c] sm:$0xf] %v2262
        %2327 = vst [vmem:[%s356 + $0x60] sm:$0xf] %v2263
        %2328 = vst [vmem:[%s356 + $0x64] sm:$0xf] %v2264
        %2329 = vst [vmem:[%s356 + $0x68] sm:$0xf] %v2265
        %2330 = vst [vmem:[%s356 + $0x6c] sm:$0xf] %v2266
        %2331 = vst [vmem:[%s356 + $0x70] sm:$0xf] %v2267
        %2332 = vst [vmem:[%s356 + $0x74] sm:$0xf] %v2268
        %2333 = vst [vmem:[%s356 + $0x78] sm:$0xf] %v2269
        %2334 = vst [vmem:[%s356 + $0x7c] sm:$0xf] %v2270
        %s2335 = sand.u32 %s183, 1
        %s2336 = sand.u32 %s183, 1
        %s2337 = smul.addr %s2336, 128
        %s2338 = scalar_lea.vmem [#allocation10], %s2337
        // Predicated region
        $region69: #{fc_network_forward.1} parent=47 // pred_check
          %p2339 = pneg %p193
        $region70: #{fc_network_forward.1} parent=47 // pred_check_branch
          %2341 = sbr.rel (%p2339) target = $region72
        $region71: #{fc_network_forward.1} parent=47 // pred_region
          %s2342 = smul.u32 32, %s23
          %s2343 = ssub.s32 38, %s2342
          %p2344 = scmp.lt.s32.totalorder %s2343, 32
          %s2345 = scalar_select %p2344, %s2343, 32
          %s2346 = smul.u32 64, %s2345
          %p2347 = scmp.ne.s32.totalorder 0, %s2346
          %s2348 = smul.addr %s2342, 4
          %s2349 = scalar_lea.vmem %s7, %s2348
          // Predicated region
          $region73: #{fc_network_forward.1} parent=71 // pred_check
            %p2350 = pneg %p2347
          $region74: #{fc_network_forward.1} parent=71 // pred_check_branch
            %2352 = sbr.rel (%p2350) target = $region76
          $region75: #{fc_network_forward.1} parent=71 // pred_region
            // Predicated region
            $region77: #{fc_network_forward.1} parent=75 // pred_check
              _
            $region78: #{fc_network_forward.1} parent=75 // pred_check_branch
              %2354 = sbr.rel target = $region80
            $region79: #{fc_network_forward.1} parent=75 // pred_region
              // Predicated region
              $region99: #{fc_network_forward.1} parent=79 // pred_check
                _
              $region100: #{fc_network_forward.1} parent=79 // pred_check_branch
                %2465 = sbr.rel (0) target = $region102
              $region101: #{fc_network_forward.1} parent=79 // pred_region
                %s2467 = sshrl.u32 %s2345, 5
                // While loop
                $region103: #{fc_network_forward.1} parent=101 // loop_pre_header
                  _
                $region104: #{fc_network_forward.1} parent=101 // loop_header
                  %s2469 = sphi 0, %s2471
                  %p2470 = scmp.ge.s32.totalorder %s2469, %s2467
                  %s2474 = sphi 0, %s2543
                  %s2475 = sphi %s2338, %s2546
                  %s2476 = sphi %s2349, %s2547
                $region105: #{fc_network_forward.1} parent=101 // loop_header_branch
                  %2473 = sbr.rel (%p2470) target = $region109
                $region106: #{fc_network_forward.1} parent=101 // loop_body
                  %v2477 = vld [vmem:[%s2475] sm:$0xf]
                  %2478 = vst [vmem:[%s2476] sm:$0xf] %v2477
                  %v2479 = vld [vmem:[%s2475 + $0x4] sm:$0xf]
                  %2480 = vst [vmem:[%s2476 + $0x4] sm:$0xf] %v2479
                  %v2481 = vld [vmem:[%s2475 + $0x8] sm:$0xf]
                  %2482 = vst [vmem:[%s2476 + $0x8] sm:$0xf] %v2481
                  %v2483 = vld [vmem:[%s2475 + $0xc] sm:$0xf]
                  %2484 = vst [vmem:[%s2476 + $0xc] sm:$0xf] %v2483
                  %v2485 = vld [vmem:[%s2475 + $0x10] sm:$0xf]
                  %2486 = vst [vmem:[%s2476 + $0x10] sm:$0xf] %v2485
                  %v2487 = vld [vmem:[%s2475 + $0x14] sm:$0xf]
                  %2488 = vst [vmem:[%s2476 + $0x14] sm:$0xf] %v2487
                  %v2489 = vld [vmem:[%s2475 + $0x18] sm:$0xf]
                  %2490 = vst [vmem:[%s2476 + $0x18] sm:$0xf] %v2489
                  %v2491 = vld [vmem:[%s2475 + $0x1c] sm:$0xf]
                  %2492 = vst [vmem:[%s2476 + $0x1c] sm:$0xf] %v2491
                  %v2493 = vld [vmem:[%s2475 + $0x20] sm:$0xf]
                  %2494 = vst [vmem:[%s2476 + $0x20] sm:$0xf] %v2493
                  %v2495 = vld [vmem:[%s2475 + $0x24] sm:$0xf]
                  %2496 = vst [vmem:[%s2476 + $0x24] sm:$0xf] %v2495
                  %v2497 = vld [vmem:[%s2475 + $0x28] sm:$0xf]
                  %2498 = vst [vmem:[%s2476 + $0x28] sm:$0xf] %v2497
                  %v2499 = vld [vmem:[%s2475 + $0x2c] sm:$0xf]
                  %2500 = vst [vmem:[%s2476 + $0x2c] sm:$0xf] %v2499
                  %v2501 = vld [vmem:[%s2475 + $0x30] sm:$0xf]
                  %2502 = vst [vmem:[%s2476 + $0x30] sm:$0xf] %v2501
                  %v2503 = vld [vmem:[%s2475 + $0x34] sm:$0xf]
                  %2504 = vst [vmem:[%s2476 + $0x34] sm:$0xf] %v2503
                  %v2505 = vld [vmem:[%s2475 + $0x38] sm:$0xf]
                  %2506 = vst [vmem:[%s2476 + $0x38] sm:$0xf] %v2505
                  %v2507 = vld [vmem:[%s2475 + $0x3c] sm:$0xf]
                  %2508 = vst [vmem:[%s2476 + $0x3c] sm:$0xf] %v2507
                  %v2509 = vld [vmem:[%s2475 + $0x40] sm:$0xf]
                  %2510 = vst [vmem:[%s2476 + $0x40] sm:$0xf] %v2509
                  %v2511 = vld [vmem:[%s2475 + $0x44] sm:$0xf]
                  %2512 = vst [vmem:[%s2476 + $0x44] sm:$0xf] %v2511
                  %v2513 = vld [vmem:[%s2475 + $0x48] sm:$0xf]
                  %2514 = vst [vmem:[%s2476 + $0x48] sm:$0xf] %v2513
                  %v2515 = vld [vmem:[%s2475 + $0x4c] sm:$0xf]
                  %2516 = vst [vmem:[%s2476 + $0x4c] sm:$0xf] %v2515
                  %v2517 = vld [vmem:[%s2475 + $0x50] sm:$0xf]
                  %2518 = vst [vmem:[%s2476 + $0x50] sm:$0xf] %v2517
                  %v2519 = vld [vmem:[%s2475 + $0x54] sm:$0xf]
                  %2520 = vst [vmem:[%s2476 + $0x54] sm:$0xf] %v2519
                  %v2521 = vld [vmem:[%s2475 + $0x58] sm:$0xf]
                  %2522 = vst [vmem:[%s2476 + $0x58] sm:$0xf] %v2521
                  %v2523 = vld [vmem:[%s2475 + $0x5c] sm:$0xf]
                  %2524 = vst [vmem:[%s2476 + $0x5c] sm:$0xf] %v2523
                  %v2525 = vld [vmem:[%s2475 + $0x60] sm:$0xf]
                  %2526 = vst [vmem:[%s2476 + $0x60] sm:$0xf] %v2525
                  %v2527 = vld [vmem:[%s2475 + $0x64] sm:$0xf]
                  %2528 = vst [vmem:[%s2476 + $0x64] sm:$0xf] %v2527
                  %v2529 = vld [vmem:[%s2475 + $0x68] sm:$0xf]
                  %2530 = vst [vmem:[%s2476 + $0x68] sm:$0xf] %v2529
                  %v2531 = vld [vmem:[%s2475 + $0x6c] sm:$0xf]
                  %2532 = vst [vmem:[%s2476 + $0x6c] sm:$0xf] %v2531
                  %v2533 = vld [vmem:[%s2475 + $0x70] sm:$0xf]
                  %2534 = vst [vmem:[%s2476 + $0x70] sm:$0xf] %v2533
                  %v2535 = vld [vmem:[%s2475 + $0x74] sm:$0xf]
                  %2536 = vst [vmem:[%s2476 + $0x74] sm:$0xf] %v2535
                  %v2537 = vld [vmem:[%s2475 + $0x78] sm:$0xf]
                  %2538 = vst [vmem:[%s2476 + $0x78] sm:$0xf] %v2537
                  %v2539 = vld [vmem:[%s2475 + $0x7c] sm:$0xf]
                  %2540 = vst [vmem:[%s2476 + $0x7c] sm:$0xf] %v2539
                  %s2541 = sadd.s32 1, %s2474
                  %p2542 = scmp.ge.s32.totalorder %s2541, %s2467
                  %s2543 = scalar_select %p2542, 0, %s2541
                  %s2544 = smul.u32 %s2543, 128
                  %s2545 = smul.u32 %s2543, 128
                  %s2546 = scalar_lea.vmem %s2338, %s2544 [#allocation10]
                  %s2547 = scalar_lea.vmem %s2349, %s2545
                $region107: #{fc_network_forward.1} parent=101 // loop_footer
                  %s2471 = sadd.s32 %s2469, 1
                $region108: #{fc_network_forward.1} parent=101 // loop_footer_branch
                  %2468 = sbr.rel target = $region104
                $region109: #{fc_network_forward.1} parent=101 // loop_exit
                  _
                %s2548 = sshrl.u32 %s2345, 5
                %s2549 = sand.u32 %s2345, 31
                %s2550 = smul.u32 %s2548, 32
                %s2551 = smul.u32 4, %s2550
                %s2552 = scalar_lea.vmem %s2338, %s2551 [#allocation10]
                %s2553 = smul.u32 4, %s2550
                %s2554 = scalar_lea.vmem %s2349, %s2553
                // While loop
                $region110: #{fc_network_forward.1} parent=101 // loop_pre_header
                  _
                $region111: #{fc_network_forward.1} parent=101 // loop_header
                  %s2556 = sphi 0, %s2558
                  %p2557 = scmp.ge.s32.totalorder %s2556, %s2549
                  %s2561 = sphi 0, %s2568
                  %s2562 = sphi %s2552, %s2571
                  %s2563 = sphi %s2554, %s2572
                $region112: #{fc_network_forward.1} parent=101 // loop_header_branch
                  %2560 = sbr.rel (%p2557) target = $region116
                $region113: #{fc_network_forward.1} parent=101 // loop_body
                  %v2564 = vld [vmem:[%s2562] sm:$0xf]
                  %2565 = vst [vmem:[%s2563] sm:$0xf] %v2564
                  %s2566 = sadd.s32 1, %s2561
                  %p2567 = scmp.ge.s32.totalorder %s2566, %s2549
                  %s2568 = scalar_select %p2567, 0, %s2566
                  %s2569 = smul.u32 %s2568, 4
                  %s2570 = smul.u32 %s2568, 4
                  %s2571 = scalar_lea.vmem %s2552, %s2569 [#allocation10]
                  %s2572 = scalar_lea.vmem %s2554, %s2570
                $region114: #{fc_network_forward.1} parent=101 // loop_footer
                  %s2558 = sadd.s32 %s2556, 1
                $region115: #{fc_network_forward.1} parent=101 // loop_footer_branch
                  %2555 = sbr.rel target = $region111
                $region116: #{fc_network_forward.1} parent=101 // loop_exit
                  _
              $region102: #{fc_network_forward.1} parent=79 // pred_fallthru
                _
            $region80: #{fc_network_forward.1} parent=75 // pred_fallthru
              _
            // Predicated region
            $region81: #{fc_network_forward.1} parent=75 // pred_check
              _
            $region82: #{fc_network_forward.1} parent=75 // pred_check_branch
              %2356 = sbr.rel (0) target = $region84
            $region83: #{fc_network_forward.1} parent=75 // pred_region
              %s2358 = sshrl.u32 %s2345, 5
              // While loop
              $region85: #{fc_network_forward.1} parent=83 // loop_pre_header
                _
              $region86: #{fc_network_forward.1} parent=83 // loop_header
                %s2360 = sphi 0, %s2362
                %p2361 = scmp.ge.s32.totalorder %s2360, %s2358
                %s2365 = sphi 0, %s2434
                %s2366 = sphi %s2338, %s2437
                %s2367 = sphi %s2349, %s2438
              $region87: #{fc_network_forward.1} parent=83 // loop_header_branch
                %2364 = sbr.rel (%p2361) target = $region91
              $region88: #{fc_network_forward.1} parent=83 // loop_body
                %v2368 = vld [vmem:[%s2366] sm:$0xf]
                %2369 = vst [vmem:[%s2367] sm:$0xf] %v2368
                %v2370 = vld [vmem:[%s2366 + $0x4] sm:$0xf]
                %2371 = vst [vmem:[%s2367 + $0x4] sm:$0xf] %v2370
                %v2372 = vld [vmem:[%s2366 + $0x8] sm:$0xf]
                %2373 = vst [vmem:[%s2367 + $0x8] sm:$0xf] %v2372
                %v2374 = vld [vmem:[%s2366 + $0xc] sm:$0xf]
                %2375 = vst [vmem:[%s2367 + $0xc] sm:$0xf] %v2374
                %v2376 = vld [vmem:[%s2366 + $0x10] sm:$0xf]
                %2377 = vst [vmem:[%s2367 + $0x10] sm:$0xf] %v2376
                %v2378 = vld [vmem:[%s2366 + $0x14] sm:$0xf]
                %2379 = vst [vmem:[%s2367 + $0x14] sm:$0xf] %v2378
                %v2380 = vld [vmem:[%s2366 + $0x18] sm:$0xf]
                %2381 = vst [vmem:[%s2367 + $0x18] sm:$0xf] %v2380
                %v2382 = vld [vmem:[%s2366 + $0x1c] sm:$0xf]
                %2383 = vst [vmem:[%s2367 + $0x1c] sm:$0xf] %v2382
                %v2384 = vld [vmem:[%s2366 + $0x20] sm:$0xf]
                %2385 = vst [vmem:[%s2367 + $0x20] sm:$0xf] %v2384
                %v2386 = vld [vmem:[%s2366 + $0x24] sm:$0xf]
                %2387 = vst [vmem:[%s2367 + $0x24] sm:$0xf] %v2386
                %v2388 = vld [vmem:[%s2366 + $0x28] sm:$0xf]
                %2389 = vst [vmem:[%s2367 + $0x28] sm:$0xf] %v2388
                %v2390 = vld [vmem:[%s2366 + $0x2c] sm:$0xf]
                %2391 = vst [vmem:[%s2367 + $0x2c] sm:$0xf] %v2390
                %v2392 = vld [vmem:[%s2366 + $0x30] sm:$0xf]
                %2393 = vst [vmem:[%s2367 + $0x30] sm:$0xf] %v2392
                %v2394 = vld [vmem:[%s2366 + $0x34] sm:$0xf]
                %2395 = vst [vmem:[%s2367 + $0x34] sm:$0xf] %v2394
                %v2396 = vld [vmem:[%s2366 + $0x38] sm:$0xf]
                %2397 = vst [vmem:[%s2367 + $0x38] sm:$0xf] %v2396
                %v2398 = vld [vmem:[%s2366 + $0x3c] sm:$0xf]
                %2399 = vst [vmem:[%s2367 + $0x3c] sm:$0xf] %v2398
                %v2400 = vld [vmem:[%s2366 + $0x40] sm:$0xf]
                %2401 = vst [vmem:[%s2367 + $0x40] sm:$0xf] %v2400
                %v2402 = vld [vmem:[%s2366 + $0x44] sm:$0xf]
                %2403 = vst [vmem:[%s2367 + $0x44] sm:$0xf] %v2402
                %v2404 = vld [vmem:[%s2366 + $0x48] sm:$0xf]
                %2405 = vst [vmem:[%s2367 + $0x48] sm:$0xf] %v2404
                %v2406 = vld [vmem:[%s2366 + $0x4c] sm:$0xf]
                %2407 = vst [vmem:[%s2367 + $0x4c] sm:$0xf] %v2406
                %v2408 = vld [vmem:[%s2366 + $0x50] sm:$0xf]
                %2409 = vst [vmem:[%s2367 + $0x50] sm:$0xf] %v2408
                %v2410 = vld [vmem:[%s2366 + $0x54] sm:$0xf]
                %2411 = vst [vmem:[%s2367 + $0x54] sm:$0xf] %v2410
                %v2412 = vld [vmem:[%s2366 + $0x58] sm:$0xf]
                %2413 = vst [vmem:[%s2367 + $0x58] sm:$0xf] %v2412
                %v2414 = vld [vmem:[%s2366 + $0x5c] sm:$0xf]
                %2415 = vst [vmem:[%s2367 + $0x5c] sm:$0xf] %v2414
                %v2416 = vld [vmem:[%s2366 + $0x60] sm:$0xf]
                %2417 = vst [vmem:[%s2367 + $0x60] sm:$0xf] %v2416
                %v2418 = vld [vmem:[%s2366 + $0x64] sm:$0xf]
                %2419 = vst [vmem:[%s2367 + $0x64] sm:$0xf] %v2418
                %v2420 = vld [vmem:[%s2366 + $0x68] sm:$0xf]
                %2421 = vst [vmem:[%s2367 + $0x68] sm:$0xf] %v2420
                %v2422 = vld [vmem:[%s2366 + $0x6c] sm:$0xf]
                %2423 = vst [vmem:[%s2367 + $0x6c] sm:$0xf] %v2422
                %v2424 = vld [vmem:[%s2366 + $0x70] sm:$0xf]
                %2425 = vst [vmem:[%s2367 + $0x70] sm:$0xf] %v2424
                %v2426 = vld [vmem:[%s2366 + $0x74] sm:$0xf]
                %2427 = vst [vmem:[%s2367 + $0x74] sm:$0xf] %v2426
                %v2428 = vld [vmem:[%s2366 + $0x78] sm:$0xf]
                %2429 = vst [vmem:[%s2367 + $0x78] sm:$0xf] %v2428
                %v2430 = vld [vmem:[%s2366 + $0x7c] sm:$0xf]
                %2431 = vst [vmem:[%s2367 + $0x7c] sm:$0xf] %v2430
                %s2432 = sadd.s32 1, %s2365
                %p2433 = scmp.ge.s32.totalorder %s2432, %s2358
                %s2434 = scalar_select %p2433, 0, %s2432
                %s2435 = smul.u32 %s2434, 128
                %s2436 = smul.u32 %s2434, 128
                %s2437 = scalar_lea.vmem %s2338, %s2435 [#allocation10]
                %s2438 = scalar_lea.vmem %s2349, %s2436
              $region89: #{fc_network_forward.1} parent=83 // loop_footer
                %s2362 = sadd.s32 %s2360, 1
              $region90: #{fc_network_forward.1} parent=83 // loop_footer_branch
                %2359 = sbr.rel target = $region86
              $region91: #{fc_network_forward.1} parent=83 // loop_exit
                _
              %s2439 = sshrl.u32 %s2345, 5
              %s2440 = sand.u32 %s2345, 31
              %s2441 = smul.u32 %s2439, 32
              %s2442 = smul.u32 4, %s2441
              %s2443 = scalar_lea.vmem %s2338, %s2442 [#allocation10]
              %s2444 = smul.u32 4, %s2441
              %s2445 = scalar_lea.vmem %s2349, %s2444
              // While loop
              $region92: #{fc_network_forward.1} parent=83 // loop_pre_header
                _
              $region93: #{fc_network_forward.1} parent=83 // loop_header
                %s2447 = sphi 0, %s2449
                %p2448 = scmp.ge.s32.totalorder %s2447, %s2440
                %s2452 = sphi 0, %s2459
                %s2453 = sphi %s2443, %s2462
                %s2454 = sphi %s2445, %s2463
              $region94: #{fc_network_forward.1} parent=83 // loop_header_branch
                %2451 = sbr.rel (%p2448) target = $region98
              $region95: #{fc_network_forward.1} parent=83 // loop_body
                %v2455 = vld [vmem:[%s2453] sm:$0xf]
                %2456 = vst [vmem:[%s2454] sm:$0xf] %v2455
                %s2457 = sadd.s32 1, %s2452
                %p2458 = scmp.ge.s32.totalorder %s2457, %s2440
                %s2459 = scalar_select %p2458, 0, %s2457
                %s2460 = smul.u32 %s2459, 4
                %s2461 = smul.u32 %s2459, 4
                %s2462 = scalar_lea.vmem %s2443, %s2460 [#allocation10]
                %s2463 = scalar_lea.vmem %s2445, %s2461
              $region96: #{fc_network_forward.1} parent=83 // loop_footer
                %s2449 = sadd.s32 %s2447, 1
              $region97: #{fc_network_forward.1} parent=83 // loop_footer_branch
                %2446 = sbr.rel target = $region93
              $region98: #{fc_network_forward.1} parent=83 // loop_exit
                _
            $region84: #{fc_network_forward.1} parent=75 // pred_fallthru
              _
          $region76: #{fc_network_forward.1} parent=71 // pred_fallthru
            _
          %2573 = vnop
        $region72: #{fc_network_forward.1} parent=47 // pred_fallthru
          _
      $region48: #{fc_network_forward.1} parent=5 // pred_fallthru
        _
      %p2574 = scmp.le.s32.totalorder 2, %s18
      // Predicated region
      $region117: #{fc_network_forward.1} parent=5 // pred_check
        %p2575 = pneg %p2574
      $region118: #{fc_network_forward.1} parent=5 // pred_check_branch
        %2577 = sbr.rel (%p2575) target = $region120
      $region119: #{fc_network_forward.1} parent=5 // pred_region
        %s2578 = ssub.s32 %s18, 2
        // Predicated region
        $region121: #{fc_network_forward.1} parent=119 // pred_check
          %p2579 = pneg %p199
        $region122: #{fc_network_forward.1} parent=119 // pred_check_branch
          %2581 = sbr.rel (%p2579) target = $region124
        $region123: #{fc_network_forward.1} parent=119 // pred_region
          %s2582 = sand.u32 %s184, 1
          %s2583 = sand.u32 %s184, 1
          %s2584 = smul.addr %s2583, 128
          %s2585 = scalar_lea.vmem [#allocation10], %s2584
        $region124: #{fc_network_forward.1} parent=119 // pred_fallthru
          _
      $region120: #{fc_network_forward.1} parent=5 // pred_fallthru
        _
    $region6: #{fc_network_forward.1} parent=1 // loop_footer
      %s22 = sadd.s32 1, %s18
    $region7: #{fc_network_forward.1} parent=1 // loop_footer_branch
      %17 = sbr.rel target = $region3
    $region8: #{fc_network_forward.1} parent=1 // loop_exit
      _
    %2586 = vsyncpa [#allocation3], 1
    %s2587 = scalar_lea.sflag [#allocation3], 1
    %2588 = vsyncpa %s2587, 1
    %2589 = vsyncpa [#allocation5], 1
    %2590 = vsyncpa [#allocation8], 1

</llo_original>
